<compile_context>
chip_gen: v5e
topology: v5e:2x2
jax: 0.10.0
libtpu: 0.0.40
codegen_flags: <defaults>
</compile_context>

<pallas_src>
import functools
import math

import numpy as np
import jax
import jax.numpy as jnp
from jax.experimental import pallas as pl
from jax.experimental.pallas import tpu as pltpu


def _round_up(n, m):
    return ((n + m - 1) // m) * m


def _cdiv(a, b):
    return (a + b - 1) // b


def _fixed_embedding_kernel(idx_ref, w_ref, o_ref, *, precision):
    """One grid step: gather tile_g * g table rows.

    idx_ref : (tile_g, g)       int32 indices, g lookups per output row
    w_ref   : (g, c_in, out_w)  copy k holds the (c_in, d_model) table placed
                                at lane offset k * d_model (block-diagonal)
    o_ref   : (tile_g, out_w)   out_w = g * d_model (lane-dense when g > 1)
    """
    tile_g, g = idx_ref.shape
    c_in = w_ref.shape[1]

    idx = idx_ref[...]                                               # (tile_g, g)
    iota = jax.lax.broadcasted_iota(jnp.int32, (tile_g, c_in), 1)

    acc = None
    for k in range(g):                        # static unroll; g is small (1..4)
        one_hot = (iota == idx[:, k:k + 1]).astype(w_ref.dtype)     # VPU compare
        term = jnp.dot(one_hot, w_ref[k],                           # MXU gather
                       preferred_element_type=jnp.float32,
                       precision=precision)
        acc = term if acc is None else acc + term
    o_ref[...] = acc.astype(o_ref.dtype)


def fixed_embedding(x, table, *, tile_rows=1024):
    """FixedEmbedding.forward: table[x] for an integer tensor x of any shape.

    `table` is the frozen (c_in, d_model) sin/cos table.  Pass it as bfloat16
    for production (halves HBM writeback; the gather stays exact).  With a
    float32 table the MXU contraction runs at Precision.HIGHEST.
    """
    c_in, d_model = table.shape
    orig_shape = tuple(x.shape)
    n = int(np.prod(orig_shape, dtype=np.int64)) if orig_shape else 1

    # ---- output packing: g consecutive lookups per 128-lane output row ------
    if d_model < 128 and 128 % d_model == 0 and n % (128 // d_model) == 0:
        g = 128 // d_model
    else:
        g = 1                      # d_model >= 128: keep it a multiple of 128
    out_w = g * d_model
    n_rows = n // g                # rows of the (packed) output

    # Block-diagonal table: copy k carries the table at lane offset k*d_model.
    if g == 1:
        w = table.reshape(1, c_in, d_model)
    else:
        w = jnp.zeros((g, c_in, out_w), table.dtype)
        for k in range(g):
            w = w.at[k, :, k * d_model:(k + 1) * d_model].set(table)

    # ---- row tiling ----------------------------------------------------------
    tile_g = _round_up(min(int(tile_rows), _round_up(n_rows, 8)), 8)
    # v7x has 2 TensorCores: ensure the "parallel" grid has >= 2 steps when
    # there is enough work (also gives double-buffering something to overlap).
    if _cdiv(n_rows, tile_g) < 2 and n_rows >= 16:
        tile_g = _round_up(_cdiv(n_rows, 2), 8)
    n_steps = _cdiv(n_rows, tile_g)

    # Indices: tiny int32 array; no output padding and no post-kernel slice --
    # the ragged last block (if any) is masked on HBM writeback by Pallas.
    idx = x.reshape(-1).astype(jnp.int32).reshape(n_rows, g)

    # ---- scoped-VMEM budget (raised only when the defaults are too small) ---
    itemsize = jnp.dtype(table.dtype).itemsize
    out_bytes = tile_g * out_w * itemsize
    idx_bytes = tile_g * 128 * 4                    # g (<128) pads to 128 lanes
    tbl_bytes = g * _round_up(c_in, 8) * _round_up(out_w, 128) * itemsize
    hot_bytes = tile_g * _round_up(c_in, 128) * 4
    need = 2 * out_bytes + 2 * idx_bytes + 2 * tbl_bytes + g * hot_bytes + (2 << 20)
    vmem_limit = None if need <= (16 << 20) else int(min(need, 60 << 20))

    precision = (jax.lax.Precision.HIGHEST if table.dtype == jnp.float32
                 else jax.lax.Precision.DEFAULT)

    def _run(single_buffer_table):
        if single_buffer_table:
            # The table block never changes; one VMEM buffer is enough
            # (matters on v7x's 64 MiB VMEM for large frozen tables).
            table_spec = pl.BlockSpec((g, c_in, out_w), lambda i: (0, 0, 0),
                                      pipeline_mode=pl.Buffered(1))
        else:
            table_spec = pl.BlockSpec((g, c_in, out_w), lambda i: (0, 0, 0))
        return pl.pallas_call(
            functools.partial(_fixed_embedding_kernel, precision=precision),
            out_shape=jax.ShapeDtypeStruct((n_rows, out_w), table.dtype),
            grid_spec=pltpu.PrefetchScalarGridSpec(
                num_scalar_prefetch=0,
                grid=(n_steps,),
                in_specs=[
                    pl.BlockSpec((tile_g, g), lambda i: (i, 0)),   # indices
                    table_spec,                                    # constant table
                ],
                out_specs=pl.BlockSpec((tile_g, out_w), lambda i: (i, 0)),
            ),
            compiler_params=pltpu.CompilerParams(
                dimension_semantics=("parallel",),
                vmem_limit_bytes=vmem_limit,
            ),
        )(idx, w)

    try:
        out = _run(True)
    except Exception:
        # pl.Buffered(1) unsupported on this JAX build -> default (still
        # constant, never re-DMA'd) double-buffered table.
        out = _run(False)

    # Row-major, metadata-only reshape back to (*x.shape, d_model).
    return out.reshape(*orig_shape, d_model)


def _fixed_embedding_table(c_in, d_model):
    """Frozen sin/cos table, identical to PyTorch FixedEmbedding.__init__."""
    position = np.arange(c_in, dtype=np.float32)[:, None]
    div_term = np.exp(np.arange(0, d_model, 2, dtype=np.float32)
                      * -(math.log(10000.0) / d_model))
    w = np.zeros((c_in, d_model), dtype=np.float32)
    w[:, 0::2] = np.sin(position * div_term)
    w[:, 1::2] = np.cos(position * div_term)
    return jnp.asarray(w)


if __name__ == "__main__":
    c_in, d_model = 24, 32                 # e.g. hour-of-day temporal embedding
    table = _fixed_embedding_table(c_in, d_model)        # float32, as in PyTorch

    # (batch=2, seq=16): exercises the packed lane-dense output path (g = 4).
    x1 = jax.random.randint(jax.random.PRNGKey(0), (2, 16), 0, c_in,
                            dtype=jnp.int32)
    out1 = jax.block_until_ready(fixed_embedding(x1, table))
    ref1 = table[x1]
    assert out1.shape == (2, 16, d_model), out1.shape
    assert out1.dtype == table.dtype
    assert jnp.allclose(out1, ref1, atol=1e-5, rtol=1e-5), "f32 packed mismatch"

    # Ragged size (n = 15): unpacked path + masked boundary block, no pad/slice.
    x2 = jax.random.randint(jax.random.PRNGKey(1), (3, 5), 0, c_in,
                            dtype=jnp.int32)
    out2 = jax.block_until_ready(fixed_embedding(x2, table))
    assert out2.shape == (3, 5, d_model), out2.shape
    assert jnp.allclose(out2, table[x2], atol=1e-5, rtol=1e-5), "ragged mismatch"

    # bfloat16 table: recommended production setting (halves HBM writeback).
    table_bf16 = table.astype(jnp.bfloat16)
    out3 = jax.block_until_ready(fixed_embedding(x1, table_bf16))
    assert out3.dtype == jnp.bfloat16
    assert jnp.allclose(out3.astype(jnp.float32),
                        table_bf16[x1].astype(jnp.float32),
                        atol=1e-3, rtol=1e-3), "bf16 mismatch"

    print("KERNEL_OK")
</pallas_src>

<mosaic_0001>
module attributes {stable_mosaic.version = 11 : i64} {
  func.func @_fixed_embedding_kernel(%arg0: i32, %arg1: memref<8x4xi32, #tpu.memory_space<vmem>>, %arg2: memref<4x24x128xf32, #tpu.memory_space<vmem>>, %arg3: memref<8x128xf32, #tpu.memory_space<vmem>>) attributes {dimension_semantics = [#tpu.dimension_semantics<parallel>], iteration_bounds = array<i64: 1>, scalar_prefetch = 0 : i64, scratch_operands = 0 : i64, tpu.core_type = #tpu.core_type<tc>, window_params = [{transform_indices = @transform_0, window_bounds = array<i64: 8, 4>}, {pipeline_mode = #tpu.pipeline_mode<synchronous>, transform_indices = @transform_1, window_bounds = array<i64: 4, 24, 128>}, {transform_indices = @transform_2, window_bounds = array<i64: 8, 128>}]} {
    %c0 = arith.constant 0 : index
    %c0_0 = arith.constant 0 : index
    %0 = vector.load %arg1[%c0, %c0_0] : memref<8x4xi32, #tpu.memory_space<vmem>>, vector<8x4xi32>
    %1 = tpu.iota {dimensions = array<i32: 1>} : vector<8x24xi32>
    %2 = vector.extract_strided_slice %0 {offsets = [0, 0], sizes = [8, 1], strides = [1, 1]} : vector<8x4xi32> to vector<8x1xi32>
    %3 = vector.broadcast %2 : vector<8x1xi32> to vector<8x24xi32>
    %4 = arith.cmpi eq, %1, %3 : vector<8x24xi32>
    %5 = arith.extui %4 : vector<8x24xi1> to vector<8x24xi32>
    %6 = arith.sitofp %5 : vector<8x24xi32> to vector<8x24xf32>
    %c0_1 = arith.constant 0 : index
    %c0_2 = arith.constant 0 : index
    %c0_3 = arith.constant 0 : index
    %7 = vector.load %arg2[%c0_1, %c0_2, %c0_3] : memref<4x24x128xf32, #tpu.memory_space<vmem>>, vector<1x24x128xf32>
    %8 = vector.shape_cast %7 : vector<1x24x128xf32> to vector<24x128xf32>
    %cst = arith.constant dense<0.000000e+00> : vector<8x128xf32>
    %9 = tpu.matmul %6, %8, %cst {dimension_numbers = #tpu.dot_dimension_numbers<[1], [0], [0], [1], [0, 0, 1, 1], [], []>, precision = #tpu.contract_precision<fp32>} : vector<8x24xf32>, vector<24x128xf32>, vector<8x128xf32> -> vector<8x128xf32>
    %10 = vector.extract_strided_slice %0 {offsets = [0, 1], sizes = [8, 1], strides = [1, 1]} : vector<8x4xi32> to vector<8x1xi32>
    %11 = vector.broadcast %10 : vector<8x1xi32> to vector<8x24xi32>
    %12 = arith.cmpi eq, %1, %11 : vector<8x24xi32>
    %13 = arith.extui %12 : vector<8x24xi1> to vector<8x24xi32>
    %14 = arith.sitofp %13 : vector<8x24xi32> to vector<8x24xf32>
    %c1 = arith.constant 1 : index
    %c0_4 = arith.constant 0 : index
    %c0_5 = arith.constant 0 : index
    %15 = vector.load %arg2[%c1, %c0_4, %c0_5] : memref<4x24x128xf32, #tpu.memory_space<vmem>>, vector<1x24x128xf32>
    %16 = vector.shape_cast %15 : vector<1x24x128xf32> to vector<24x128xf32>
    %cst_6 = arith.constant dense<0.000000e+00> : vector<8x128xf32>
    %17 = tpu.matmul %14, %16, %cst_6 {dimension_numbers = #tpu.dot_dimension_numbers<[1], [0], [0], [1], [0, 0, 1, 1], [], []>, precision = #tpu.contract_precision<fp32>} : vector<8x24xf32>, vector<24x128xf32>, vector<8x128xf32> -> vector<8x128xf32>
    %18 = arith.addf %9, %17 : vector<8x128xf32>
    %19 = vector.extract_strided_slice %0 {offsets = [0, 2], sizes = [8, 1], strides = [1, 1]} : vector<8x4xi32> to vector<8x1xi32>
    %20 = vector.broadcast %19 : vector<8x1xi32> to vector<8x24xi32>
    %21 = arith.cmpi eq, %1, %20 : vector<8x24xi32>
    %22 = arith.extui %21 : vector<8x24xi1> to vector<8x24xi32>
    %23 = arith.sitofp %22 : vector<8x24xi32> to vector<8x24xf32>
    %c2 = arith.constant 2 : index
    %c0_7 = arith.constant 0 : index
    %c0_8 = arith.constant 0 : index
    %24 = vector.load %arg2[%c2, %c0_7, %c0_8] : memref<4x24x128xf32, #tpu.memory_space<vmem>>, vector<1x24x128xf32>
    %25 = vector.shape_cast %24 : vector<1x24x128xf32> to vector<24x128xf32>
    %cst_9 = arith.constant dense<0.000000e+00> : vector<8x128xf32>
    %26 = tpu.matmul %23, %25, %cst_9 {dimension_numbers = #tpu.dot_dimension_numbers<[1], [0], [0], [1], [0, 0, 1, 1], [], []>, precision = #tpu.contract_precision<fp32>} : vector<8x24xf32>, vector<24x128xf32>, vector<8x128xf32> -> vector<8x128xf32>
    %27 = arith.addf %18, %26 : vector<8x128xf32>
    %28 = vector.extract_strided_slice %0 {offsets = [0, 3], sizes = [8, 1], strides = [1, 1]} : vector<8x4xi32> to vector<8x1xi32>
    %29 = vector.broadcast %28 : vector<8x1xi32> to vector<8x24xi32>
    %30 = arith.cmpi eq, %1, %29 : vector<8x24xi32>
    %31 = arith.extui %30 : vector<8x24xi1> to vector<8x24xi32>
    %32 = arith.sitofp %31 : vector<8x24xi32> to vector<8x24xf32>
    %c3 = arith.constant 3 : index
    %c0_10 = arith.constant 0 : index
    %c0_11 = arith.constant 0 : index
    %33 = vector.load %arg2[%c3, %c0_10, %c0_11] : memref<4x24x128xf32, #tpu.memory_space<vmem>>, vector<1x24x128xf32>
    %34 = vector.shape_cast %33 : vector<1x24x128xf32> to vector<24x128xf32>
    %cst_12 = arith.constant dense<0.000000e+00> : vector<8x128xf32>
    %35 = tpu.matmul %32, %34, %cst_12 {dimension_numbers = #tpu.dot_dimension_numbers<[1], [0], [0], [1], [0, 0, 1, 1], [], []>, precision = #tpu.contract_precision<fp32>} : vector<8x24xf32>, vector<24x128xf32>, vector<8x128xf32> -> vector<8x128xf32>
    %36 = arith.addf %27, %35 : vector<8x128xf32>
    %c0_13 = arith.constant 0 : index
    %c0_14 = arith.constant 0 : index
    %37 = vector.load %arg3[%c0_13, %c0_14] : memref<8x128xf32, #tpu.memory_space<vmem>>, vector<8x128xf32>
    tpu.vector_store %arg3[%c0_13, %c0_14], %36 {strides = array<i32>} : memref<8x128xf32, #tpu.memory_space<vmem>>, vector<8x128xf32>,
    return
  }
  func.func @transform_0(%arg0: i32) -> (i32, i32) {
    %c0_i32 = arith.constant 0 : i32
    %c0_i32_0 = arith.constant 0 : i32
    return %arg0, %c0_i32 : i32, i32
  }
  func.func @transform_1(%arg0: i32) -> (i32, i32, i32) {
    %c0_i32 = arith.constant 0 : i32
    %c0_i32_0 = arith.constant 0 : i32
    %c0_i32_1 = arith.constant 0 : i32
    %c0_i32_2 = arith.constant 0 : i32
    return %c0_i32, %c0_i32_0, %c0_i32_1 : i32, i32, i32
  }
  func.func @transform_2(%arg0: i32) -> (i32, i32) {
    %c0_i32 = arith.constant 0 : i32
    %c0_i32_0 = arith.constant 0 : i32
    return %arg0, %c0_i32 : i32, i32
  }
}

module attributes {stable_mosaic.version = 11 : i64} {
  func.func @_fixed_embedding_kernel(%arg0: i32, %arg1: memref<8x4xi32, #tpu.memory_space<vmem>>, %arg2: memref<4x24x128xf32, #tpu.memory_space<vmem>>, %arg3: memref<8x128xf32, #tpu.memory_space<vmem>>) attributes {dimension_semantics = [#tpu.dimension_semantics<parallel>], iteration_bounds = array<i64: 1>, scalar_prefetch = 0 : i64, scratch_operands = 0 : i64, tpu.core_type = #tpu.core_type<tc>, window_params = [{transform_indices = @transform_0, window_bounds = array<i64: 8, 4>}, {pipeline_mode = #tpu.pipeline_mode<synchronous>, transform_indices = @transform_1, window_bounds = array<i64: 4, 24, 128>}, {transform_indices = @transform_2, window_bounds = array<i64: 8, 128>}]} {
    %c0 = arith.constant 0 : index
    %c0_0 = arith.constant 0 : index
    %0 = vector.load %arg1[%c0, %c0_0] : memref<8x4xi32, #tpu.memory_space<vmem>>, vector<8x4xi32>
    %1 = tpu.iota {dimensions = array<i32: 1>} : vector<8x24xi32>
    %2 = vector.extract_strided_slice %0 {offsets = [0, 0], sizes = [8, 1], strides = [1, 1]} : vector<8x4xi32> to vector<8x1xi32>
    %3 = vector.broadcast %2 : vector<8x1xi32> to vector<8x24xi32>
    %4 = arith.cmpi eq, %1, %3 : vector<8x24xi32>
    %5 = arith.extui %4 : vector<8x24xi1> to vector<8x24xi32>
    %6 = arith.sitofp %5 : vector<8x24xi32> to vector<8x24xf32>
    %c0_1 = arith.constant 0 : index
    %c0_2 = arith.constant 0 : index
    %c0_3 = arith.constant 0 : index
    %7 = vector.load %arg2[%c0_1, %c0_2, %c0_3] : memref<4x24x128xf32, #tpu.memory_space<vmem>>, vector<1x24x128xf32>
    %8 = vector.shape_cast %7 : vector<1x24x128xf32> to vector<24x128xf32>
    %cst = arith.constant dense<0.000000e+00> : vector<8x128xf32>
    %9 = tpu.matmul %6, %8, %cst {dimension_numbers = #tpu.dot_dimension_numbers<[1], [0], [0], [1], [0, 0, 1, 1], [], []>, precision = #tpu.contract_precision<fp32>} : vector<8x24xf32>, vector<24x128xf32>, vector<8x128xf32> -> vector<8x128xf32>
    %10 = vector.extract_strided_slice %0 {offsets = [0, 1], sizes = [8, 1], strides = [1, 1]} : vector<8x4xi32> to vector<8x1xi32>
    %11 = vector.broadcast %10 : vector<8x1xi32> to vector<8x24xi32>
    %12 = arith.cmpi eq, %1, %11 : vector<8x24xi32>
    %13 = arith.extui %12 : vector<8x24xi1> to vector<8x24xi32>
    %14 = arith.sitofp %13 : vector<8x24xi32> to vector<8x24xf32>
    %c1 = arith.constant 1 : index
    %c0_4 = arith.constant 0 : index
    %c0_5 = arith.constant 0 : index
    %15 = vector.load %arg2[%c1, %c0_4, %c0_5] : memref<4x24x128xf32, #tpu.memory_space<vmem>>, vector<1x24x128xf32>
    %16 = vector.shape_cast %15 : vector<1x24x128xf32> to vector<24x128xf32>
    %cst_6 = arith.constant dense<0.000000e+00> : vector<8x128xf32>
    %17 = tpu.matmul %14, %16, %cst_6 {dimension_numbers = #tpu.dot_dimension_numbers<[1], [0], [0], [1], [0, 0, 1, 1], [], []>, precision = #tpu.contract_precision<fp32>} : vector<8x24xf32>, vector<24x128xf32>, vector<8x128xf32> -> vector<8x128xf32>
    %18 = arith.addf %9, %17 : vector<8x128xf32>
    %19 = vector.extract_strided_slice %0 {offsets = [0, 2], sizes = [8, 1], strides = [1, 1]} : vector<8x4xi32> to vector<8x1xi32>
    %20 = vector.broadcast %19 : vector<8x1xi32> to vector<8x24xi32>
    %21 = arith.cmpi eq, %1, %20 : vector<8x24xi32>
    %22 = arith.extui %21 : vector<8x24xi1> to vector<8x24xi32>
    %23 = arith.sitofp %22 : vector<8x24xi32> to vector<8x24xf32>
    %c2 = arith.constant 2 : index
    %c0_7 = arith.constant 0 : index
    %c0_8 = arith.constant 0 : index
    %24 = vector.load %arg2[%c2, %c0_7, %c0_8] : memref<4x24x128xf32, #tpu.memory_space<vmem>>, vector<1x24x128xf32>
    %25 = vector.shape_cast %24 : vector<1x24x128xf32> to vector<24x128xf32>
    %cst_9 = arith.constant dense<0.000000e+00> : vector<8x128xf32>
    %26 = tpu.matmul %23, %25, %cst_9 {dimension_numbers = #tpu.dot_dimension_numbers<[1], [0], [0], [1], [0, 0, 1, 1], [], []>, precision = #tpu.contract_precision<fp32>} : vector<8x24xf32>, vector<24x128xf32>, vector<8x128xf32> -> vector<8x128xf32>
    %27 = arith.addf %18, %26 : vector<8x128xf32>
    %28 = vector.extract_strided_slice %0 {offsets = [0, 3], sizes = [8, 1], strides = [1, 1]} : vector<8x4xi32> to vector<8x1xi32>
    %29 = vector.broadcast %28 : vector<8x1xi32> to vector<8x24xi32>
    %30 = arith.cmpi eq, %1, %29 : vector<8x24xi32>
    %31 = arith.extui %30 : vector<8x24xi1> to vector<8x24xi32>
    %32 = arith.sitofp %31 : vector<8x24xi32> to vector<8x24xf32>
    %c3 = arith.constant 3 : index
    %c0_10 = arith.constant 0 : index
    %c0_11 = arith.constant 0 : index
    %33 = vector.load %arg2[%c3, %c0_10, %c0_11] : memref<4x24x128xf32, #tpu.memory_space<vmem>>, vector<1x24x128xf32>
    %34 = vector.shape_cast %33 : vector<1x24x128xf32> to vector<24x128xf32>
    %cst_12 = arith.constant dense<0.000000e+00> : vector<8x128xf32>
    %35 = tpu.matmul %32, %34, %cst_12 {dimension_numbers = #tpu.dot_dimension_numbers<[1], [0], [0], [1], [0, 0, 1, 1], [], []>, precision = #tpu.contract_precision<fp32>} : vector<8x24xf32>, vector<24x128xf32>, vector<8x128xf32> -> vector<8x128xf32>
    %36 = arith.addf %27, %35 : vector<8x128xf32>
    %c0_13 = arith.constant 0 : index
    %c0_14 = arith.constant 0 : index
    %37 = vector.load %arg3[%c0_13, %c0_14] : memref<8x128xf32, #tpu.memory_space<vmem>>, vector<8x128xf32>
    tpu.vector_store %arg3[%c0_13, %c0_14], %36 {strides = array<i32>} : memref<8x128xf32, #tpu.memory_space<vmem>>, vector<8x128xf32>,
    return
  }
  func.func @transform_0(%arg0: i32) -> (i32, i32) {
    %c0_i32 = arith.constant 0 : i32
    %c0_i32_0 = arith.constant 0 : i32
    return %arg0, %c0_i32 : i32, i32
  }
  func.func @transform_1(%arg0: i32) -> (i32, i32, i32) {
    %c0_i32 = arith.constant 0 : i32
    %c0_i32_0 = arith.constant 0 : i32
    %c0_i32_1 = arith.constant 0 : i32
    %c0_i32_2 = arith.constant 0 : i32
    return %c0_i32, %c0_i32_0, %c0_i32_1 : i32, i32, i32
  }
  func.func @transform_2(%arg0: i32) -> (i32, i32) {
    %c0_i32 = arith.constant 0 : i32
    %c0_i32_0 = arith.constant 0 : i32
    return %arg0, %c0_i32 : i32, i32
  }
}

</mosaic_0001>

<llo_original>
// kernel: tpu_custom_call.1
$region0: #{tpu_custom_call.1}
  #allocation0 [shape = 'u32[]', space=smem, size = 0x4, offset = 0x4, fixed_abs, tag = 'smem constant byte address 0x4 - core index']
  #allocation1 [shape = 'u32[72,128]{1,0:T(1,128)}', space=vmem, size = 0x9000, scoped, tag = 'internal scratch']
  %s0 = inlined_call_operand.vmem [shape: s32[8,4], index: 0, kind: input, shape index: {}]
  %s1 = inlined_call_operand.hbm [shape: f32[4,24,128], index: 1, kind: input, shape index: {}]
  %s2 = inlined_call_operand.hbm [shape: f32[8,128], index: 2, kind: output, shape index: {}]
  %s3 = sld [smem:[#allocation0]]
  $region22: #{tpu_custom_call.1} parent=0
    _
  %s5 = ssub.s32 1, %s3
  %s6 = scalar_select 0, %s5, %s3
  $region1: #{tpu_custom_call.1} parent=0
    #allocation2 [shape = 'u8[49152]{0}', space=vmem, size = 0xc000, scoped, tag = 'input window, operand 1, single buffered']
    #allocation3 [shape = 's32[1]{0}', space=sflag, size = 0x4, scoped, tag = 'scoped memory for tpu_custom_call.1']
    #allocation4 [shape = 's32[1]{0}', space=sflag, size = 0x4, scoped, tag = 'scoped memory for tpu_custom_call.1']
    #allocation5 [shape = 'u8[4096]{0}', space=vmem, size = 0x1000, scoped, tag = 'output window, operand 0, single buffered']
    %7 = vsyncpa [#allocation3], 0
    %8 = vsyncpa [#allocation4], 0
    // Predicated region
    $region2: #{tpu_custom_call.1} parent=1 // pred_check
      _
    $region3: #{tpu_custom_call.1} parent=1 // pred_check_branch
      %10 = sbr.rel (0) target = $region5
    $region4: #{tpu_custom_call.1} parent=1 // pred_region
      _
    $region5: #{tpu_custom_call.1} parent=1 // pred_fallthru
      _
    // Predicated region
    $region6: #{tpu_custom_call.1} parent=1 // pred_check
      _
    $region7: #{tpu_custom_call.1} parent=1 // pred_check_branch
      %12 = sbr.rel (0) target = $region9
    $region8: #{tpu_custom_call.1} parent=1 // pred_region
      %14 = vsyncadd [#allocation3], 0
      %s15 = sshll.u32 %s1, 4
      %s16 = int_to_ptr.hbm [resolvable:$true] %s15
      %s17 = sshll.u32 [#allocation2], 4
      %s18 = int_to_ptr.vmem [resolvable:$true] %s17
      %23 = dma.hbm_to_vmem [thread:$0]  %s16, 1536, %s18, [#allocation3], 128, 128, 8
    $region9: #{tpu_custom_call.1} parent=1 // pred_fallthru
      _
    // Predicated region
    $region10: #{tpu_custom_call.1} parent=1 // pred_check
      _
    $region11: #{tpu_custom_call.1} parent=1 // pred_check_branch
      %25 = sbr.rel (0) target = $region13
    $region12: #{tpu_custom_call.1} parent=1 // pred_region
      %27 = dma.done [#allocation3], 1536
    $region13: #{tpu_custom_call.1} parent=1 // pred_fallthru
      _
    %v28 = vld [vmem:[%s0] sm:$0xff]
    %v29 = vlaneseq
    %v30 = vand.u32 %v29, 127
    %31 = vset.pattern.permute.xlu0 0
    %32 = vperm.xlu0 %31, %v28
    %v33 = vpop.permute.xlu0 %32
    %vm34 = vcmp.eq.s32.totalorder %v30, %v33
    %v35 = vsel %vm34, 1, 0
    %v36 = vcvt.s32.f32 %v35
    %v37 = vld [vmem:[#allocation2] sm:$0xff]
    %v38 = vld [vmem:[#allocation2 + $0x8] sm:$0xff]
    %v39 = vld [vmem:[#allocation2 + $0x10] sm:$0xff]
    %40 = vset.pattern.permute.xlu0 1
    %41 = vperm.xlu0 %40, %v28
    %v42 = vpop.permute.xlu0 %41
    %vm43 = vcmp.eq.s32.totalorder %v30, %v42
    %v44 = vsel %vm43, 1, 0
    %v45 = vcvt.s32.f32 %v44
    %s46 = scalar_lea.vmem [#allocation2], 24
    %v47 = vld [vmem:[%s46] sm:$0xff]
    %v48 = vld [vmem:[%s46 + $0x8] sm:$0xff]
    %v49 = vld [vmem:[%s46 + $0x10] sm:$0xff]
    %vm50 = vcmask 195584
    %v52 = vsel %vm50, %v45, 0
    %54 = vmatpush.msra.mxu0 0.0
    %55 = vmatpush.msra.mxu0 0.0
    %56 = vmatpush.msra.mxu0 0.0
    %57 = vmatpush.msra.mxu0 0.0
    %58 = vmatpush.msra.mxu0 0.0
    %59 = vmatpush.msra.mxu0 0.0
    %60 = vmatpush.msra.mxu0 0.0
    %61 = vmatpush.msra.mxu0 0.0
    %62 = vmatpush.msra.mxu0 0.0
    %63 = vmatpush.msra.mxu0 0.0
    %64 = vmatpush.msra.mxu0 0.0
    %65 = vmatpush.msra.mxu0 0.0
    %66 = vmatpush.msra.mxu0 0.0
    %v67 = vand.u32 %v49, 4294901760
    %68 = vmatpush.msra.mxu0 %v67
    %v69 = vand.u32 %v48, 4294901760
    %70 = vmatpush.msra.mxu0 %v69
    %v71 = vand.u32 %v47, 4294901760
    %72 = vmatpush.msra.mxu0 %v71
    %v73 = vand.u32 %v52, 4294901760
    %v74 = vsub.f32 %v52, %v73
    %v75 = vand.u32 %v74, 4294901760
    %v76 = vsub.f32 %v74, %v75
    %v77 = vand.u32 %v76, 4294901760
    %78 = vmatmul.f32.gmra.mxu0 %v77
    %v79 = vpop.f32.mrf.mxu0
    %v80 = vadd.f32 0.0, %v79
    %81 = vdwg.mxu0
    %82 = vmatpush.msra.mxu0 0.0
    %83 = vmatpush.msra.mxu0 0.0
    %84 = vmatpush.msra.mxu0 0.0
    %85 = vmatpush.msra.mxu0 0.0
    %86 = vmatpush.msra.mxu0 0.0
    %87 = vmatpush.msra.mxu0 0.0
    %88 = vmatpush.msra.mxu0 0.0
    %89 = vmatpush.msra.mxu0 0.0
    %90 = vmatpush.msra.mxu0 0.0
    %91 = vmatpush.msra.mxu0 0.0
    %92 = vmatpush.msra.mxu0 0.0
    %93 = vmatpush.msra.mxu0 0.0
    %94 = vmatpush.msra.mxu0 0.0
    %v95 = vand.u32 %v49, 4294901760
    %v96 = vsub.f32 %v49, %v95
    %v97 = vand.u32 %v96, 4294901760
    %v98 = vsub.f32 %v96, %v97
    %v99 = vand.u32 %v98, 4294901760
    %100 = vmatpush.msra.mxu0 %v99
    %v101 = vand.u32 %v48, 4294901760
    %v102 = vsub.f32 %v48, %v101
    %v103 = vand.u32 %v102, 4294901760
    %v104 = vsub.f32 %v102, %v103
    %v105 = vand.u32 %v104, 4294901760
    %106 = vmatpush.msra.mxu0 %v105
    %v107 = vand.u32 %v47, 4294901760
    %v108 = vsub.f32 %v47, %v107
    %v109 = vand.u32 %v108, 4294901760
    %v110 = vsub.f32 %v108, %v109
    %v111 = vand.u32 %v110, 4294901760
    %112 = vmatpush.msra.mxu0 %v111
    %v113 = vand.u32 %v52, 4294901760
    %114 = vmatmul.f32.gmra.mxu0 %v113
    %v115 = vpop.f32.mrf.mxu0
    %v116 = vadd.f32 %v80, %v115
    %117 = vdwg.mxu0
    %118 = vmatpush.msra.mxu0 0.0
    %119 = vmatpush.msra.mxu0 0.0
    %120 = vmatpush.msra.mxu0 0.0
    %121 = vmatpush.msra.mxu0 0.0
    %122 = vmatpush.msra.mxu0 0.0
    %123 = vmatpush.msra.mxu0 0.0
    %124 = vmatpush.msra.mxu0 0.0
    %125 = vmatpush.msra.mxu0 0.0
    %126 = vmatpush.msra.mxu0 0.0
    %127 = vmatpush.msra.mxu0 0.0
    %128 = vmatpush.msra.mxu0 0.0
    %129 = vmatpush.msra.mxu0 0.0
    %130 = vmatpush.msra.mxu0 0.0
    %v131 = vand.u32 %v49, 4294901760
    %v132 = vsub.f32 %v49, %v131
    %133 = vmatpush.msra.mxu0 %v132
    %v134 = vand.u32 %v48, 4294901760
    %v135 = vsub.f32 %v48, %v134
    %136 = vmatpush.msra.mxu0 %v135
    %v137 = vand.u32 %v47, 4294901760
    %v138 = vsub.f32 %v47, %v137
    %139 = vmatpush.msra.mxu0 %v138
    %v140 = vand.u32 %v52, 4294901760
    %v141 = vsub.f32 %v52, %v140
    %142 = vmatmul.f32.gmra.mxu0 %v141
    %v143 = vpop.f32.mrf.mxu0
    %v144 = vadd.f32 %v116, %v143
    %145 = vdwg.mxu0
    %146 = vmatpush.msra.mxu0 0.0
    %147 = vmatpush.msra.mxu0 0.0
    %148 = vmatpush.msra.mxu0 0.0
    %149 = vmatpush.msra.mxu0 0.0
    %150 = vmatpush.msra.mxu0 0.0
    %151 = vmatpush.msra.mxu0 0.0
    %152 = vmatpush.msra.mxu0 0.0
    %153 = vmatpush.msra.mxu0 0.0
    %154 = vmatpush.msra.mxu0 0.0
    %155 = vmatpush.msra.mxu0 0.0
    %156 = vmatpush.msra.mxu0 0.0
    %157 = vmatpush.msra.mxu0 0.0
    %158 = vmatpush.msra.mxu0 0.0
    %v159 = vand.u32 %v49, 4294901760
    %160 = vmatpush.msra.mxu0 %v159
    %v161 = vand.u32 %v48, 4294901760
    %162 = vmatpush.msra.mxu0 %v161
    %v163 = vand.u32 %v47, 4294901760
    %164 = vmatpush.msra.mxu0 %v163
    %v165 = vand.u32 %v52, 4294901760
    %v166 = vsub.f32 %v52, %v165
    %v167 = vand.u32 %v166, 4294901760
    %168 = vmatmul.f32.gmra.mxu0 %v167
    %v169 = vpop.f32.mrf.mxu0
    %v170 = vadd.f32 %v144, %v169
    %171 = vdwg.mxu0
    %172 = vmatpush.msra.mxu0 0.0
    %173 = vmatpush.msra.mxu0 0.0
    %174 = vmatpush.msra.mxu0 0.0
    %175 = vmatpush.msra.mxu0 0.0
    %176 = vmatpush.msra.mxu0 0.0
    %177 = vmatpush.msra.mxu0 0.0
    %178 = vmatpush.msra.mxu0 0.0
    %179 = vmatpush.msra.mxu0 0.0
    %180 = vmatpush.msra.mxu0 0.0
    %181 = vmatpush.msra.mxu0 0.0
    %182 = vmatpush.msra.mxu0 0.0
    %183 = vmatpush.msra.mxu0 0.0
    %184 = vmatpush.msra.mxu0 0.0
    %v185 = vand.u32 %v49, 4294901760
    %v186 = vsub.f32 %v49, %v185
    %v187 = vand.u32 %v186, 4294901760
    %188 = vmatpush.msra.mxu0 %v187
    %v189 = vand.u32 %v48, 4294901760
    %v190 = vsub.f32 %v48, %v189
    %v191 = vand.u32 %v190, 4294901760
    %192 = vmatpush.msra.mxu0 %v191
    %v193 = vand.u32 %v47, 4294901760
    %v194 = vsub.f32 %v47, %v193
    %v195 = vand.u32 %v194, 4294901760
    %196 = vmatpush.msra.mxu0 %v195
    %v197 = vand.u32 %v52, 4294901760
    %198 = vmatmul.f32.gmra.mxu0 %v197
    %v199 = vpop.f32.mrf.mxu0
    %v200 = vadd.f32 %v170, %v199
    %201 = vdwg.mxu0
    %202 = vmatpush.msra.mxu0 0.0
    %203 = vmatpush.msra.mxu0 0.0
    %204 = vmatpush.msra.mxu0 0.0
    %205 = vmatpush.msra.mxu0 0.0
    %206 = vmatpush.msra.mxu0 0.0
    %207 = vmatpush.msra.mxu0 0.0
    %208 = vmatpush.msra.mxu0 0.0
    %209 = vmatpush.msra.mxu0 0.0
    %210 = vmatpush.msra.mxu0 0.0
    %211 = vmatpush.msra.mxu0 0.0
    %212 = vmatpush.msra.mxu0 0.0
    %213 = vmatpush.msra.mxu0 0.0
    %214 = vmatpush.msra.mxu0 0.0
    %v215 = vand.u32 %v49, 4294901760
    %216 = vmatpush.msra.mxu0 %v215
    %v217 = vand.u32 %v48, 4294901760
    %218 = vmatpush.msra.mxu0 %v217
    %v219 = vand.u32 %v47, 4294901760
    %220 = vmatpush.msra.mxu0 %v219
    %v221 = vand.u32 %v52, 4294901760
    %222 = vmatmul.f32.gmra.mxu0 %v221
    %v223 = vpop.f32.mrf.mxu0
    %v224 = vadd.f32 %v200, %v223
    %225 = vdwg.mxu0
    %v227 = vsel %vm50, %v36, 0
    %229 = vmatpush.msra.mxu0 0.0
    %230 = vmatpush.msra.mxu0 0.0
    %231 = vmatpush.msra.mxu0 0.0
    %232 = vmatpush.msra.mxu0 0.0
    %233 = vmatpush.msra.mxu0 0.0
    %234 = vmatpush.msra.mxu0 0.0
    %235 = vmatpush.msra.mxu0 0.0
    %236 = vmatpush.msra.mxu0 0.0
    %237 = vmatpush.msra.mxu0 0.0
    %238 = vmatpush.msra.mxu0 0.0
    %239 = vmatpush.msra.mxu0 0.0
    %240 = vmatpush.msra.mxu0 0.0
    %241 = vmatpush.msra.mxu0 0.0
    %v242 = vand.u32 %v39, 4294901760
    %243 = vmatpush.msra.mxu0 %v242
    %v244 = vand.u32 %v38, 4294901760
    %245 = vmatpush.msra.mxu0 %v244
    %v246 = vand.u32 %v37, 4294901760
    %247 = vmatpush.msra.mxu0 %v246
    %v248 = vand.u32 %v227, 4294901760
    %v249 = vsub.f32 %v227, %v248
    %v250 = vand.u32 %v249, 4294901760
    %v251 = vsub.f32 %v249, %v250
    %v252 = vand.u32 %v251, 4294901760
    %253 = vmatmul.f32.gmra.mxu0 %v252
    %v254 = vpop.f32.mrf.mxu0
    %v255 = vadd.f32 %v224, %v254
    %256 = vdwg.mxu0
    %257 = vmatpush.msra.mxu0 0.0
    %258 = vmatpush.msra.mxu0 0.0
    %259 = vmatpush.msra.mxu0 0.0
    %260 = vmatpush.msra.mxu0 0.0
    %261 = vmatpush.msra.mxu0 0.0
    %262 = vmatpush.msra.mxu0 0.0
    %263 = vmatpush.msra.mxu0 0.0
    %264 = vmatpush.msra.mxu0 0.0
    %265 = vmatpush.msra.mxu0 0.0
    %266 = vmatpush.msra.mxu0 0.0
    %267 = vmatpush.msra.mxu0 0.0
    %268 = vmatpush.msra.mxu0 0.0
    %269 = vmatpush.msra.mxu0 0.0
    %v270 = vand.u32 %v39, 4294901760
    %v271 = vsub.f32 %v39, %v270
    %v272 = vand.u32 %v271, 4294901760
    %v273 = vsub.f32 %v271, %v272
    %v274 = vand.u32 %v273, 4294901760
    %275 = vmatpush.msra.mxu0 %v274
    %v276 = vand.u32 %v38, 4294901760
    %v277 = vsub.f32 %v38, %v276
    %v278 = vand.u32 %v277, 4294901760
    %v279 = vsub.f32 %v277, %v278
    %v280 = vand.u32 %v279, 4294901760
    %281 = vmatpush.msra.mxu0 %v280
    %v282 = vand.u32 %v37, 4294901760
    %v283 = vsub.f32 %v37, %v282
    %v284 = vand.u32 %v283, 4294901760
    %v285 = vsub.f32 %v283, %v284
    %v286 = vand.u32 %v285, 4294901760
    %287 = vmatpush.msra.mxu0 %v286
    %v288 = vand.u32 %v227, 4294901760
    %289 = vmatmul.f32.gmra.mxu0 %v288
    %v290 = vpop.f32.mrf.mxu0
    %v291 = vadd.f32 %v255, %v290
    %292 = vdwg.mxu0
    %293 = vmatpush.msra.mxu0 0.0
    %294 = vmatpush.msra.mxu0 0.0
    %295 = vmatpush.msra.mxu0 0.0
    %296 = vmatpush.msra.mxu0 0.0
    %297 = vmatpush.msra.mxu0 0.0
    %298 = vmatpush.msra.mxu0 0.0
    %299 = vmatpush.msra.mxu0 0.0
    %300 = vmatpush.msra.mxu0 0.0
    %301 = vmatpush.msra.mxu0 0.0
    %302 = vmatpush.msra.mxu0 0.0
    %303 = vmatpush.msra.mxu0 0.0
    %304 = vmatpush.msra.mxu0 0.0
    %305 = vmatpush.msra.mxu0 0.0
    %v306 = vand.u32 %v39, 4294901760
    %v307 = vsub.f32 %v39, %v306
    %308 = vmatpush.msra.mxu0 %v307
    %v309 = vand.u32 %v38, 4294901760
    %v310 = vsub.f32 %v38, %v309
    %311 = vmatpush.msra.mxu0 %v310
    %v312 = vand.u32 %v37, 4294901760
    %v313 = vsub.f32 %v37, %v312
    %314 = vmatpush.msra.mxu0 %v313
    %v315 = vand.u32 %v227, 4294901760
    %v316 = vsub.f32 %v227, %v315
    %317 = vmatmul.f32.gmra.mxu0 %v316
    %v318 = vpop.f32.mrf.mxu0
    %v319 = vadd.f32 %v291, %v318
    %320 = vdwg.mxu0
    %321 = vmatpush.msra.mxu0 0.0
    %322 = vmatpush.msra.mxu0 0.0
    %323 = vmatpush.msra.mxu0 0.0
    %324 = vmatpush.msra.mxu0 0.0
    %325 = vmatpush.msra.mxu0 0.0
    %326 = vmatpush.msra.mxu0 0.0
    %327 = vmatpush.msra.mxu0 0.0
    %328 = vmatpush.msra.mxu0 0.0
    %329 = vmatpush.msra.mxu0 0.0
    %330 = vmatpush.msra.mxu0 0.0
    %331 = vmatpush.msra.mxu0 0.0
    %332 = vmatpush.msra.mxu0 0.0
    %333 = vmatpush.msra.mxu0 0.0
    %v334 = vand.u32 %v39, 4294901760
    %335 = vmatpush.msra.mxu0 %v334
    %v336 = vand.u32 %v38, 4294901760
    %337 = vmatpush.msra.mxu0 %v336
    %v338 = vand.u32 %v37, 4294901760
    %339 = vmatpush.msra.mxu0 %v338
    %v340 = vand.u32 %v227, 4294901760
    %v341 = vsub.f32 %v227, %v340
    %v342 = vand.u32 %v341, 4294901760
    %343 = vmatmul.f32.gmra.mxu0 %v342
    %v344 = vpop.f32.mrf.mxu0
    %v345 = vadd.f32 %v319, %v344
    %346 = vdwg.mxu0
    %347 = vmatpush.msra.mxu0 0.0
    %348 = vmatpush.msra.mxu0 0.0
    %349 = vmatpush.msra.mxu0 0.0
    %350 = vmatpush.msra.mxu0 0.0
    %351 = vmatpush.msra.mxu0 0.0
    %352 = vmatpush.msra.mxu0 0.0
    %353 = vmatpush.msra.mxu0 0.0
    %354 = vmatpush.msra.mxu0 0.0
    %355 = vmatpush.msra.mxu0 0.0
    %356 = vmatpush.msra.mxu0 0.0
    %357 = vmatpush.msra.mxu0 0.0
    %358 = vmatpush.msra.mxu0 0.0
    %359 = vmatpush.msra.mxu0 0.0
    %v360 = vand.u32 %v39, 4294901760
    %v361 = vsub.f32 %v39, %v360
    %v362 = vand.u32 %v361, 4294901760
    %363 = vmatpush.msra.mxu0 %v362
    %v364 = vand.u32 %v38, 4294901760
    %v365 = vsub.f32 %v38, %v364
    %v366 = vand.u32 %v365, 4294901760
    %367 = vmatpush.msra.mxu0 %v366
    %v368 = vand.u32 %v37, 4294901760
    %v369 = vsub.f32 %v37, %v368
    %v370 = vand.u32 %v369, 4294901760
    %371 = vmatpush.msra.mxu0 %v370
    %v372 = vand.u32 %v227, 4294901760
    %373 = vmatmul.f32.gmra.mxu0 %v372
    %v374 = vpop.f32.mrf.mxu0
    %v375 = vadd.f32 %v345, %v374
    %376 = vdwg.mxu0
    %377 = vmatpush.msra.mxu0 0.0
    %378 = vmatpush.msra.mxu0 0.0
    %379 = vmatpush.msra.mxu0 0.0
    %380 = vmatpush.msra.mxu0 0.0
    %381 = vmatpush.msra.mxu0 0.0
    %382 = vmatpush.msra.mxu0 0.0
    %383 = vmatpush.msra.mxu0 0.0
    %384 = vmatpush.msra.mxu0 0.0
    %385 = vmatpush.msra.mxu0 0.0
    %386 = vmatpush.msra.mxu0 0.0
    %387 = vmatpush.msra.mxu0 0.0
    %388 = vmatpush.msra.mxu0 0.0
    %389 = vmatpush.msra.mxu0 0.0
    %v390 = vand.u32 %v39, 4294901760
    %391 = vmatpush.msra.mxu0 %v390
    %v392 = vand.u32 %v38, 4294901760
    %393 = vmatpush.msra.mxu0 %v392
    %v394 = vand.u32 %v37, 4294901760
    %395 = vmatpush.msra.mxu0 %v394
    %v396 = vand.u32 %v227, 4294901760
    %397 = vmatmul.f32.gmra.mxu0 %v396
    %v398 = vpop.f32.mrf.mxu0
    %v399 = vadd.f32 %v375, %v398
    %400 = vdwg.mxu0
    %401 = vset.pattern.permute.xlu0 2
    %402 = vperm.xlu0 %401, %v28
    %v403 = vpop.permute.xlu0 %402
    %vm404 = vcmp.eq.s32.totalorder %v30, %v403
    %v405 = vsel %vm404, 1, 0
    %v406 = vcvt.s32.f32 %v405
    %s407 = scalar_lea.vmem [#allocation2], 48
    %v408 = vld [vmem:[%s407] sm:$0xff]
    %v409 = vld [vmem:[%s407 + $0x8] sm:$0xff]
    %v410 = vld [vmem:[%s407 + $0x10] sm:$0xff]
    %v412 = vsel %vm50, %v406, 0
    %414 = vmatpush.msra.mxu0 0.0
    %415 = vmatpush.msra.mxu0 0.0
    %416 = vmatpush.msra.mxu0 0.0
    %417 = vmatpush.msra.mxu0 0.0
    %418 = vmatpush.msra.mxu0 0.0
    %419 = vmatpush.msra.mxu0 0.0
    %420 = vmatpush.msra.mxu0 0.0
    %421 = vmatpush.msra.mxu0 0.0
    %422 = vmatpush.msra.mxu0 0.0
    %423 = vmatpush.msra.mxu0 0.0
    %424 = vmatpush.msra.mxu0 0.0
    %425 = vmatpush.msra.mxu0 0.0
    %426 = vmatpush.msra.mxu0 0.0
    %v427 = vand.u32 %v410, 4294901760
    %428 = vmatpush.msra.mxu0 %v427
    %v429 = vand.u32 %v409, 4294901760
    %430 = vmatpush.msra.mxu0 %v429
    %v431 = vand.u32 %v408, 4294901760
    %432 = vmatpush.msra.mxu0 %v431
    %v433 = vand.u32 %v412, 4294901760
    %v434 = vsub.f32 %v412, %v433
    %v435 = vand.u32 %v434, 4294901760
    %v436 = vsub.f32 %v434, %v435
    %v437 = vand.u32 %v436, 4294901760
    %438 = vmatmul.f32.gmra.mxu0 %v437
    %v439 = vpop.f32.mrf.mxu0
    %v440 = vadd.f32 0.0, %v439
    %441 = vdwg.mxu0
    %442 = vmatpush.msra.mxu0 0.0
    %443 = vmatpush.msra.mxu0 0.0
    %444 = vmatpush.msra.mxu0 0.0
    %445 = vmatpush.msra.mxu0 0.0
    %446 = vmatpush.msra.mxu0 0.0
    %447 = vmatpush.msra.mxu0 0.0
    %448 = vmatpush.msra.mxu0 0.0
    %449 = vmatpush.msra.mxu0 0.0
    %450 = vmatpush.msra.mxu0 0.0
    %451 = vmatpush.msra.mxu0 0.0
    %452 = vmatpush.msra.mxu0 0.0
    %453 = vmatpush.msra.mxu0 0.0
    %454 = vmatpush.msra.mxu0 0.0
    %v455 = vand.u32 %v410, 4294901760
    %v456 = vsub.f32 %v410, %v455
    %v457 = vand.u32 %v456, 4294901760
    %v458 = vsub.f32 %v456, %v457
    %v459 = vand.u32 %v458, 4294901760
    %460 = vmatpush.msra.mxu0 %v459
    %v461 = vand.u32 %v409, 4294901760
    %v462 = vsub.f32 %v409, %v461
    %v463 = vand.u32 %v462, 4294901760
    %v464 = vsub.f32 %v462, %v463
    %v465 = vand.u32 %v464, 4294901760
    %466 = vmatpush.msra.mxu0 %v465
    %v467 = vand.u32 %v408, 4294901760
    %v468 = vsub.f32 %v408, %v467
    %v469 = vand.u32 %v468, 4294901760
    %v470 = vsub.f32 %v468, %v469
    %v471 = vand.u32 %v470, 4294901760
    %472 = vmatpush.msra.mxu0 %v471
    %v473 = vand.u32 %v412, 4294901760
    %474 = vmatmul.f32.gmra.mxu0 %v473
    %v475 = vpop.f32.mrf.mxu0
    %v476 = vadd.f32 %v440, %v475
    %477 = vdwg.mxu0
    %478 = vmatpush.msra.mxu0 0.0
    %479 = vmatpush.msra.mxu0 0.0
    %480 = vmatpush.msra.mxu0 0.0
    %481 = vmatpush.msra.mxu0 0.0
    %482 = vmatpush.msra.mxu0 0.0
    %483 = vmatpush.msra.mxu0 0.0
    %484 = vmatpush.msra.mxu0 0.0
    %485 = vmatpush.msra.mxu0 0.0
    %486 = vmatpush.msra.mxu0 0.0
    %487 = vmatpush.msra.mxu0 0.0
    %488 = vmatpush.msra.mxu0 0.0
    %489 = vmatpush.msra.mxu0 0.0
    %490 = vmatpush.msra.mxu0 0.0
    %v491 = vand.u32 %v410, 4294901760
    %v492 = vsub.f32 %v410, %v491
    %493 = vmatpush.msra.mxu0 %v492
    %v494 = vand.u32 %v409, 4294901760
    %v495 = vsub.f32 %v409, %v494
    %496 = vmatpush.msra.mxu0 %v495
    %v497 = vand.u32 %v408, 4294901760
    %v498 = vsub.f32 %v408, %v497
    %499 = vmatpush.msra.mxu0 %v498
    %v500 = vand.u32 %v412, 4294901760
    %v501 = vsub.f32 %v412, %v500
    %502 = vmatmul.f32.gmra.mxu0 %v501
    %v503 = vpop.f32.mrf.mxu0
    %v504 = vadd.f32 %v476, %v503
    %505 = vdwg.mxu0
    %506 = vmatpush.msra.mxu0 0.0
    %507 = vmatpush.msra.mxu0 0.0
    %508 = vmatpush.msra.mxu0 0.0
    %509 = vmatpush.msra.mxu0 0.0
    %510 = vmatpush.msra.mxu0 0.0
    %511 = vmatpush.msra.mxu0 0.0
    %512 = vmatpush.msra.mxu0 0.0
    %513 = vmatpush.msra.mxu0 0.0
    %514 = vmatpush.msra.mxu0 0.0
    %515 = vmatpush.msra.mxu0 0.0
    %516 = vmatpush.msra.mxu0 0.0
    %517 = vmatpush.msra.mxu0 0.0
    %518 = vmatpush.msra.mxu0 0.0
    %v519 = vand.u32 %v410, 4294901760
    %520 = vmatpush.msra.mxu0 %v519
    %v521 = vand.u32 %v409, 4294901760
    %522 = vmatpush.msra.mxu0 %v521
    %v523 = vand.u32 %v408, 4294901760
    %524 = vmatpush.msra.mxu0 %v523
    %v525 = vand.u32 %v412, 4294901760
    %v526 = vsub.f32 %v412, %v525
    %v527 = vand.u32 %v526, 4294901760
    %528 = vmatmul.f32.gmra.mxu0 %v527
    %v529 = vpop.f32.mrf.mxu0
    %v530 = vadd.f32 %v504, %v529
    %531 = vdwg.mxu0
    %532 = vmatpush.msra.mxu0 0.0
    %533 = vmatpush.msra.mxu0 0.0
    %534 = vmatpush.msra.mxu0 0.0
    %535 = vmatpush.msra.mxu0 0.0
    %536 = vmatpush.msra.mxu0 0.0
    %537 = vmatpush.msra.mxu0 0.0
    %538 = vmatpush.msra.mxu0 0.0
    %539 = vmatpush.msra.mxu0 0.0
    %540 = vmatpush.msra.mxu0 0.0
    %541 = vmatpush.msra.mxu0 0.0
    %542 = vmatpush.msra.mxu0 0.0
    %543 = vmatpush.msra.mxu0 0.0
    %544 = vmatpush.msra.mxu0 0.0
    %v545 = vand.u32 %v410, 4294901760
    %v546 = vsub.f32 %v410, %v545
    %v547 = vand.u32 %v546, 4294901760
    %548 = vmatpush.msra.mxu0 %v547
    %v549 = vand.u32 %v409, 4294901760
    %v550 = vsub.f32 %v409, %v549
    %v551 = vand.u32 %v550, 4294901760
    %552 = vmatpush.msra.mxu0 %v551
    %v553 = vand.u32 %v408, 4294901760
    %v554 = vsub.f32 %v408, %v553
    %v555 = vand.u32 %v554, 4294901760
    %556 = vmatpush.msra.mxu0 %v555
    %v557 = vand.u32 %v412, 4294901760
    %558 = vmatmul.f32.gmra.mxu0 %v557
    %v559 = vpop.f32.mrf.mxu0
    %v560 = vadd.f32 %v530, %v559
    %561 = vdwg.mxu0
    %562 = vmatpush.msra.mxu0 0.0
    %563 = vmatpush.msra.mxu0 0.0
    %564 = vmatpush.msra.mxu0 0.0
    %565 = vmatpush.msra.mxu0 0.0
    %566 = vmatpush.msra.mxu0 0.0
    %567 = vmatpush.msra.mxu0 0.0
    %568 = vmatpush.msra.mxu0 0.0
    %569 = vmatpush.msra.mxu0 0.0
    %570 = vmatpush.msra.mxu0 0.0
    %571 = vmatpush.msra.mxu0 0.0
    %572 = vmatpush.msra.mxu0 0.0
    %573 = vmatpush.msra.mxu0 0.0
    %574 = vmatpush.msra.mxu0 0.0
    %v575 = vand.u32 %v410, 4294901760
    %576 = vmatpush.msra.mxu0 %v575
    %v577 = vand.u32 %v409, 4294901760
    %578 = vmatpush.msra.mxu0 %v577
    %v579 = vand.u32 %v408, 4294901760
    %580 = vmatpush.msra.mxu0 %v579
    %v581 = vand.u32 %v412, 4294901760
    %582 = vmatmul.f32.gmra.mxu0 %v581
    %v583 = vpop.f32.mrf.mxu0
    %v584 = vadd.f32 %v560, %v583
    %585 = vdwg.mxu0
    %v586 = vadd.f32 %v399, %v584
    %587 = vset.pattern.permute.xlu0 3
    %588 = vperm.xlu0 %587, %v28
    %v589 = vpop.permute.xlu0 %588
    %vm590 = vcmp.eq.s32.totalorder %v30, %v589
    %v591 = vsel %vm590, 1, 0
    %v592 = vcvt.s32.f32 %v591
    %s593 = scalar_lea.vmem [#allocation2], 72
    %v594 = vld [vmem:[%s593] sm:$0xff]
    %v595 = vld [vmem:[%s593 + $0x8] sm:$0xff]
    %v596 = vld [vmem:[%s593 + $0x10] sm:$0xff]
    %v598 = vsel %vm50, %v592, 0
    %600 = vmatpush.msra.mxu0 0.0
    %601 = vmatpush.msra.mxu0 0.0
    %602 = vmatpush.msra.mxu0 0.0
    %603 = vmatpush.msra.mxu0 0.0
    %604 = vmatpush.msra.mxu0 0.0
    %605 = vmatpush.msra.mxu0 0.0
    %606 = vmatpush.msra.mxu0 0.0
    %607 = vmatpush.msra.mxu0 0.0
    %608 = vmatpush.msra.mxu0 0.0
    %609 = vmatpush.msra.mxu0 0.0
    %610 = vmatpush.msra.mxu0 0.0
    %611 = vmatpush.msra.mxu0 0.0
    %612 = vmatpush.msra.mxu0 0.0
    %v613 = vand.u32 %v596, 4294901760
    %614 = vmatpush.msra.mxu0 %v613
    %v615 = vand.u32 %v595, 4294901760
    %616 = vmatpush.msra.mxu0 %v615
    %v617 = vand.u32 %v594, 4294901760
    %618 = vmatpush.msra.mxu0 %v617
    %v619 = vand.u32 %v598, 4294901760
    %v620 = vsub.f32 %v598, %v619
    %v621 = vand.u32 %v620, 4294901760
    %v622 = vsub.f32 %v620, %v621
    %v623 = vand.u32 %v622, 4294901760
    %624 = vmatmul.f32.gmra.mxu0 %v623
    %v625 = vpop.f32.mrf.mxu0
    %v626 = vadd.f32 0.0, %v625
    %627 = vdwg.mxu0
    %628 = vmatpush.msra.mxu0 0.0
    %629 = vmatpush.msra.mxu0 0.0
    %630 = vmatpush.msra.mxu0 0.0
    %631 = vmatpush.msra.mxu0 0.0
    %632 = vmatpush.msra.mxu0 0.0
    %633 = vmatpush.msra.mxu0 0.0
    %634 = vmatpush.msra.mxu0 0.0
    %635 = vmatpush.msra.mxu0 0.0
    %636 = vmatpush.msra.mxu0 0.0
    %637 = vmatpush.msra.mxu0 0.0
    %638 = vmatpush.msra.mxu0 0.0
    %639 = vmatpush.msra.mxu0 0.0
    %640 = vmatpush.msra.mxu0 0.0
    %v641 = vand.u32 %v596, 4294901760
    %v642 = vsub.f32 %v596, %v641
    %v643 = vand.u32 %v642, 4294901760
    %v644 = vsub.f32 %v642, %v643
    %v645 = vand.u32 %v644, 4294901760
    %646 = vmatpush.msra.mxu0 %v645
    %v647 = vand.u32 %v595, 4294901760
    %v648 = vsub.f32 %v595, %v647
    %v649 = vand.u32 %v648, 4294901760
    %v650 = vsub.f32 %v648, %v649
    %v651 = vand.u32 %v650, 4294901760
    %652 = vmatpush.msra.mxu0 %v651
    %v653 = vand.u32 %v594, 4294901760
    %v654 = vsub.f32 %v594, %v653
    %v655 = vand.u32 %v654, 4294901760
    %v656 = vsub.f32 %v654, %v655
    %v657 = vand.u32 %v656, 4294901760
    %658 = vmatpush.msra.mxu0 %v657
    %v659 = vand.u32 %v598, 4294901760
    %660 = vmatmul.f32.gmra.mxu0 %v659
    %v661 = vpop.f32.mrf.mxu0
    %v662 = vadd.f32 %v626, %v661
    %663 = vdwg.mxu0
    %664 = vmatpush.msra.mxu0 0.0
    %665 = vmatpush.msra.mxu0 0.0
    %666 = vmatpush.msra.mxu0 0.0
    %667 = vmatpush.msra.mxu0 0.0
    %668 = vmatpush.msra.mxu0 0.0
    %669 = vmatpush.msra.mxu0 0.0
    %670 = vmatpush.msra.mxu0 0.0
    %671 = vmatpush.msra.mxu0 0.0
    %672 = vmatpush.msra.mxu0 0.0
    %673 = vmatpush.msra.mxu0 0.0
    %674 = vmatpush.msra.mxu0 0.0
    %675 = vmatpush.msra.mxu0 0.0
    %676 = vmatpush.msra.mxu0 0.0
    %v677 = vand.u32 %v596, 4294901760
    %v678 = vsub.f32 %v596, %v677
    %679 = vmatpush.msra.mxu0 %v678
    %v680 = vand.u32 %v595, 4294901760
    %v681 = vsub.f32 %v595, %v680
    %682 = vmatpush.msra.mxu0 %v681
    %v683 = vand.u32 %v594, 4294901760
    %v684 = vsub.f32 %v594, %v683
    %685 = vmatpush.msra.mxu0 %v684
    %v686 = vand.u32 %v598, 4294901760
    %v687 = vsub.f32 %v598, %v686
    %688 = vmatmul.f32.gmra.mxu0 %v687
    %v689 = vpop.f32.mrf.mxu0
    %v690 = vadd.f32 %v662, %v689
    %691 = vdwg.mxu0
    %692 = vmatpush.msra.mxu0 0.0
    %693 = vmatpush.msra.mxu0 0.0
    %694 = vmatpush.msra.mxu0 0.0
    %695 = vmatpush.msra.mxu0 0.0
    %696 = vmatpush.msra.mxu0 0.0
    %697 = vmatpush.msra.mxu0 0.0
    %698 = vmatpush.msra.mxu0 0.0
    %699 = vmatpush.msra.mxu0 0.0
    %700 = vmatpush.msra.mxu0 0.0
    %701 = vmatpush.msra.mxu0 0.0
    %702 = vmatpush.msra.mxu0 0.0
    %703 = vmatpush.msra.mxu0 0.0
    %704 = vmatpush.msra.mxu0 0.0
    %v705 = vand.u32 %v596, 4294901760
    %706 = vmatpush.msra.mxu0 %v705
    %v707 = vand.u32 %v595, 4294901760
    %708 = vmatpush.msra.mxu0 %v707
    %v709 = vand.u32 %v594, 4294901760
    %710 = vmatpush.msra.mxu0 %v709
    %v711 = vand.u32 %v598, 4294901760
    %v712 = vsub.f32 %v598, %v711
    %v713 = vand.u32 %v712, 4294901760
    %714 = vmatmul.f32.gmra.mxu0 %v713
    %v715 = vpop.f32.mrf.mxu0
    %v716 = vadd.f32 %v690, %v715
    %717 = vdwg.mxu0
    %718 = vmatpush.msra.mxu0 0.0
    %719 = vmatpush.msra.mxu0 0.0
    %720 = vmatpush.msra.mxu0 0.0
    %721 = vmatpush.msra.mxu0 0.0
    %722 = vmatpush.msra.mxu0 0.0
    %723 = vmatpush.msra.mxu0 0.0
    %724 = vmatpush.msra.mxu0 0.0
    %725 = vmatpush.msra.mxu0 0.0
    %726 = vmatpush.msra.mxu0 0.0
    %727 = vmatpush.msra.mxu0 0.0
    %728 = vmatpush.msra.mxu0 0.0
    %729 = vmatpush.msra.mxu0 0.0
    %730 = vmatpush.msra.mxu0 0.0
    %v731 = vand.u32 %v596, 4294901760
    %v732 = vsub.f32 %v596, %v731
    %v733 = vand.u32 %v732, 4294901760
    %734 = vmatpush.msra.mxu0 %v733
    %v735 = vand.u32 %v595, 4294901760
    %v736 = vsub.f32 %v595, %v735
    %v737 = vand.u32 %v736, 4294901760
    %738 = vmatpush.msra.mxu0 %v737
    %v739 = vand.u32 %v594, 4294901760
    %v740 = vsub.f32 %v594, %v739
    %v741 = vand.u32 %v740, 4294901760
    %742 = vmatpush.msra.mxu0 %v741
    %v743 = vand.u32 %v598, 4294901760
    %744 = vmatmul.f32.gmra.mxu0 %v743
    %v745 = vpop.f32.mrf.mxu0
    %v746 = vadd.f32 %v716, %v745
    %747 = vdwg.mxu0
    %748 = vmatpush.msra.mxu0 0.0
    %749 = vmatpush.msra.mxu0 0.0
    %750 = vmatpush.msra.mxu0 0.0
    %751 = vmatpush.msra.mxu0 0.0
    %752 = vmatpush.msra.mxu0 0.0
    %753 = vmatpush.msra.mxu0 0.0
    %754 = vmatpush.msra.mxu0 0.0
    %755 = vmatpush.msra.mxu0 0.0
    %756 = vmatpush.msra.mxu0 0.0
    %757 = vmatpush.msra.mxu0 0.0
    %758 = vmatpush.msra.mxu0 0.0
    %759 = vmatpush.msra.mxu0 0.0
    %760 = vmatpush.msra.mxu0 0.0
    %v761 = vand.u32 %v596, 4294901760
    %762 = vmatpush.msra.mxu0 %v761
    %v763 = vand.u32 %v595, 4294901760
    %764 = vmatpush.msra.mxu0 %v763
    %v765 = vand.u32 %v594, 4294901760
    %766 = vmatpush.msra.mxu0 %v765
    %v767 = vand.u32 %v598, 4294901760
    %768 = vmatmul.f32.gmra.mxu0 %v767
    %v769 = vpop.f32.mrf.mxu0
    %v770 = vadd.f32 %v746, %v769
    %771 = vdwg.mxu0
    %v772 = vadd.f32 %v586, %v770
    %773 = vst [vmem:[#allocation5] sm:$0xff] %v772
    // Predicated region
    $region14: #{tpu_custom_call.1} parent=1 // pred_check
      _
    $region15: #{tpu_custom_call.1} parent=1 // pred_check_branch
      %775 = sbr.rel (0) target = $region17
    $region16: #{tpu_custom_call.1} parent=1 // pred_region
      %777 = vsyncadd [#allocation4], 0
      %s779 = sshll.u32 [#allocation5], 4
      %s780 = int_to_ptr.vmem [resolvable:$true] %s779
      %s781 = sshll.u32 %s2, 4
      %s782 = int_to_ptr.hbm [resolvable:$true] %s781
      %784 = dma.vmem_to_hbm [thread:$0]  %s780, 128, %s782, [#allocation4]
    $region17: #{tpu_custom_call.1} parent=1 // pred_fallthru
      _
    // Predicated region
    $region18: #{tpu_custom_call.1} parent=1 // pred_check
      _
    $region19: #{tpu_custom_call.1} parent=1 // pred_check_branch
      %786 = sbr.rel (0) target = $region21
    $region20: #{tpu_custom_call.1} parent=1 // pred_region
      %788 = dma.done [#allocation4], 128
    $region21: #{tpu_custom_call.1} parent=1 // pred_fallthru
      _
    %789 = vsyncpa [#allocation3], 1
    %790 = vsyncpa [#allocation4], 1

// kernel: tpu_custom_call.1
$region0: #{tpu_custom_call.1}
  #allocation0 [shape = 'u32[]', space=smem, size = 0x4, offset = 0x4, fixed_abs, tag = 'smem constant byte address 0x4 - core index']
  #allocation1 [shape = 'u32[72,128]{1,0:T(1,128)}', space=vmem, size = 0x9000, scoped, tag = 'internal scratch']
  %s0 = inlined_call_operand.vmem [shape: s32[8,4], index: 0, kind: input, shape index: {}]
  %s1 = inlined_call_operand.hbm [shape: f32[4,24,128], index: 1, kind: input, shape index: {}]
  %s2 = inlined_call_operand.hbm [shape: f32[8,128], index: 2, kind: output, shape index: {}]
  %s3 = sld [smem:[#allocation0]]
  $region22: #{tpu_custom_call.1} parent=0
    _
  %s5 = ssub.s32 1, %s3
  %s6 = scalar_select 0, %s5, %s3
  $region1: #{tpu_custom_call.1} parent=0
    #allocation2 [shape = 'u8[49152]{0}', space=vmem, size = 0xc000, scoped, tag = 'input window, operand 1, single buffered']
    #allocation3 [shape = 's32[1]{0}', space=sflag, size = 0x4, scoped, tag = 'scoped memory for tpu_custom_call.1']
    #allocation4 [shape = 's32[1]{0}', space=sflag, size = 0x4, scoped, tag = 'scoped memory for tpu_custom_call.1']
    #allocation5 [shape = 'u8[4096]{0}', space=vmem, size = 0x1000, scoped, tag = 'output window, operand 0, single buffered']
    %7 = vsyncpa [#allocation3], 0
    %8 = vsyncpa [#allocation4], 0
    // Predicated region
    $region2: #{tpu_custom_call.1} parent=1 // pred_check
      _
    $region3: #{tpu_custom_call.1} parent=1 // pred_check_branch
      %10 = sbr.rel (0) target = $region5
    $region4: #{tpu_custom_call.1} parent=1 // pred_region
      _
    $region5: #{tpu_custom_call.1} parent=1 // pred_fallthru
      _
    // Predicated region
    $region6: #{tpu_custom_call.1} parent=1 // pred_check
      _
    $region7: #{tpu_custom_call.1} parent=1 // pred_check_branch
      %12 = sbr.rel (0) target = $region9
    $region8: #{tpu_custom_call.1} parent=1 // pred_region
      %14 = vsyncadd [#allocation3], 0
      %s15 = sshll.u32 %s1, 4
      %s16 = int_to_ptr.hbm [resolvable:$true] %s15
      %s17 = sshll.u32 [#allocation2], 4
      %s18 = int_to_ptr.vmem [resolvable:$true] %s17
      %23 = dma.hbm_to_vmem [thread:$0]  %s16, 1536, %s18, [#allocation3], 128, 128, 8
    $region9: #{tpu_custom_call.1} parent=1 // pred_fallthru
      _
    // Predicated region
    $region10: #{tpu_custom_call.1} parent=1 // pred_check
      _
    $region11: #{tpu_custom_call.1} parent=1 // pred_check_branch
      %25 = sbr.rel (0) target = $region13
    $region12: #{tpu_custom_call.1} parent=1 // pred_region
      %27 = dma.done [#allocation3], 1536
    $region13: #{tpu_custom_call.1} parent=1 // pred_fallthru
      _
    %v28 = vld [vmem:[%s0] sm:$0xff]
    %v29 = vlaneseq
    %v30 = vand.u32 %v29, 127
    %31 = vset.pattern.permute.xlu0 0
    %32 = vperm.xlu0 %31, %v28
    %v33 = vpop.permute.xlu0 %32
    %vm34 = vcmp.eq.s32.totalorder %v30, %v33
    %v35 = vsel %vm34, 1, 0
    %v36 = vcvt.s32.f32 %v35
    %v37 = vld [vmem:[#allocation2] sm:$0xff]
    %v38 = vld [vmem:[#allocation2 + $0x8] sm:$0xff]
    %v39 = vld [vmem:[#allocation2 + $0x10] sm:$0xff]
    %40 = vset.pattern.permute.xlu0 1
    %41 = vperm.xlu0 %40, %v28
    %v42 = vpop.permute.xlu0 %41
    %vm43 = vcmp.eq.s32.totalorder %v30, %v42
    %v44 = vsel %vm43, 1, 0
    %v45 = vcvt.s32.f32 %v44
    %s46 = scalar_lea.vmem [#allocation2], 24
    %v47 = vld [vmem:[%s46] sm:$0xff]
    %v48 = vld [vmem:[%s46 + $0x8] sm:$0xff]
    %v49 = vld [vmem:[%s46 + $0x10] sm:$0xff]
    %vm50 = vcmask 195584
    %v52 = vsel %vm50, %v45, 0
    %54 = vmatpush.msra.mxu0 0.0
    %55 = vmatpush.msra.mxu0 0.0
    %56 = vmatpush.msra.mxu0 0.0
    %57 = vmatpush.msra.mxu0 0.0
    %58 = vmatpush.msra.mxu0 0.0
    %59 = vmatpush.msra.mxu0 0.0
    %60 = vmatpush.msra.mxu0 0.0
    %61 = vmatpush.msra.mxu0 0.0
    %62 = vmatpush.msra.mxu0 0.0
    %63 = vmatpush.msra.mxu0 0.0
    %64 = vmatpush.msra.mxu0 0.0
    %65 = vmatpush.msra.mxu0 0.0
    %66 = vmatpush.msra.mxu0 0.0
    %v67 = vand.u32 %v49, 4294901760
    %68 = vmatpush.msra.mxu0 %v67
    %v69 = vand.u32 %v48, 4294901760
    %70 = vmatpush.msra.mxu0 %v69
    %v71 = vand.u32 %v47, 4294901760
    %72 = vmatpush.msra.mxu0 %v71
    %v73 = vand.u32 %v52, 4294901760
    %v74 = vsub.f32 %v52, %v73
    %v75 = vand.u32 %v74, 4294901760
    %v76 = vsub.f32 %v74, %v75
    %v77 = vand.u32 %v76, 4294901760
    %78 = vmatmul.f32.gmra.mxu0 %v77
    %v79 = vpop.f32.mrf.mxu0
    %v80 = vadd.f32 0.0, %v79
    %81 = vdwg.mxu0
    %82 = vmatpush.msra.mxu0 0.0
    %83 = vmatpush.msra.mxu0 0.0
    %84 = vmatpush.msra.mxu0 0.0
    %85 = vmatpush.msra.mxu0 0.0
    %86 = vmatpush.msra.mxu0 0.0
    %87 = vmatpush.msra.mxu0 0.0
    %88 = vmatpush.msra.mxu0 0.0
    %89 = vmatpush.msra.mxu0 0.0
    %90 = vmatpush.msra.mxu0 0.0
    %91 = vmatpush.msra.mxu0 0.0
    %92 = vmatpush.msra.mxu0 0.0
    %93 = vmatpush.msra.mxu0 0.0
    %94 = vmatpush.msra.mxu0 0.0
    %v95 = vand.u32 %v49, 4294901760
    %v96 = vsub.f32 %v49, %v95
    %v97 = vand.u32 %v96, 4294901760
    %v98 = vsub.f32 %v96, %v97
    %v99 = vand.u32 %v98, 4294901760
    %100 = vmatpush.msra.mxu0 %v99
    %v101 = vand.u32 %v48, 4294901760
    %v102 = vsub.f32 %v48, %v101
    %v103 = vand.u32 %v102, 4294901760
    %v104 = vsub.f32 %v102, %v103
    %v105 = vand.u32 %v104, 4294901760
    %106 = vmatpush.msra.mxu0 %v105
    %v107 = vand.u32 %v47, 4294901760
    %v108 = vsub.f32 %v47, %v107
    %v109 = vand.u32 %v108, 4294901760
    %v110 = vsub.f32 %v108, %v109
    %v111 = vand.u32 %v110, 4294901760
    %112 = vmatpush.msra.mxu0 %v111
    %v113 = vand.u32 %v52, 4294901760
    %114 = vmatmul.f32.gmra.mxu0 %v113
    %v115 = vpop.f32.mrf.mxu0
    %v116 = vadd.f32 %v80, %v115
    %117 = vdwg.mxu0
    %118 = vmatpush.msra.mxu0 0.0
    %119 = vmatpush.msra.mxu0 0.0
    %120 = vmatpush.msra.mxu0 0.0
    %121 = vmatpush.msra.mxu0 0.0
    %122 = vmatpush.msra.mxu0 0.0
    %123 = vmatpush.msra.mxu0 0.0
    %124 = vmatpush.msra.mxu0 0.0
    %125 = vmatpush.msra.mxu0 0.0
    %126 = vmatpush.msra.mxu0 0.0
    %127 = vmatpush.msra.mxu0 0.0
    %128 = vmatpush.msra.mxu0 0.0
    %129 = vmatpush.msra.mxu0 0.0
    %130 = vmatpush.msra.mxu0 0.0
    %v131 = vand.u32 %v49, 4294901760
    %v132 = vsub.f32 %v49, %v131
    %133 = vmatpush.msra.mxu0 %v132
    %v134 = vand.u32 %v48, 4294901760
    %v135 = vsub.f32 %v48, %v134
    %136 = vmatpush.msra.mxu0 %v135
    %v137 = vand.u32 %v47, 4294901760
    %v138 = vsub.f32 %v47, %v137
    %139 = vmatpush.msra.mxu0 %v138
    %v140 = vand.u32 %v52, 4294901760
    %v141 = vsub.f32 %v52, %v140
    %142 = vmatmul.f32.gmra.mxu0 %v141
    %v143 = vpop.f32.mrf.mxu0
    %v144 = vadd.f32 %v116, %v143
    %145 = vdwg.mxu0
    %146 = vmatpush.msra.mxu0 0.0
    %147 = vmatpush.msra.mxu0 0.0
    %148 = vmatpush.msra.mxu0 0.0
    %149 = vmatpush.msra.mxu0 0.0
    %150 = vmatpush.msra.mxu0 0.0
    %151 = vmatpush.msra.mxu0 0.0
    %152 = vmatpush.msra.mxu0 0.0
    %153 = vmatpush.msra.mxu0 0.0
    %154 = vmatpush.msra.mxu0 0.0
    %155 = vmatpush.msra.mxu0 0.0
    %156 = vmatpush.msra.mxu0 0.0
    %157 = vmatpush.msra.mxu0 0.0
    %158 = vmatpush.msra.mxu0 0.0
    %v159 = vand.u32 %v49, 4294901760
    %160 = vmatpush.msra.mxu0 %v159
    %v161 = vand.u32 %v48, 4294901760
    %162 = vmatpush.msra.mxu0 %v161
    %v163 = vand.u32 %v47, 4294901760
    %164 = vmatpush.msra.mxu0 %v163
    %v165 = vand.u32 %v52, 4294901760
    %v166 = vsub.f32 %v52, %v165
    %v167 = vand.u32 %v166, 4294901760
    %168 = vmatmul.f32.gmra.mxu0 %v167
    %v169 = vpop.f32.mrf.mxu0
    %v170 = vadd.f32 %v144, %v169
    %171 = vdwg.mxu0
    %172 = vmatpush.msra.mxu0 0.0
    %173 = vmatpush.msra.mxu0 0.0
    %174 = vmatpush.msra.mxu0 0.0
    %175 = vmatpush.msra.mxu0 0.0
    %176 = vmatpush.msra.mxu0 0.0
    %177 = vmatpush.msra.mxu0 0.0
    %178 = vmatpush.msra.mxu0 0.0
    %179 = vmatpush.msra.mxu0 0.0
    %180 = vmatpush.msra.mxu0 0.0
    %181 = vmatpush.msra.mxu0 0.0
    %182 = vmatpush.msra.mxu0 0.0
    %183 = vmatpush.msra.mxu0 0.0
    %184 = vmatpush.msra.mxu0 0.0
    %v185 = vand.u32 %v49, 4294901760
    %v186 = vsub.f32 %v49, %v185
    %v187 = vand.u32 %v186, 4294901760
    %188 = vmatpush.msra.mxu0 %v187
    %v189 = vand.u32 %v48, 4294901760
    %v190 = vsub.f32 %v48, %v189
    %v191 = vand.u32 %v190, 4294901760
    %192 = vmatpush.msra.mxu0 %v191
    %v193 = vand.u32 %v47, 4294901760
    %v194 = vsub.f32 %v47, %v193
    %v195 = vand.u32 %v194, 4294901760
    %196 = vmatpush.msra.mxu0 %v195
    %v197 = vand.u32 %v52, 4294901760
    %198 = vmatmul.f32.gmra.mxu0 %v197
    %v199 = vpop.f32.mrf.mxu0
    %v200 = vadd.f32 %v170, %v199
    %201 = vdwg.mxu0
    %202 = vmatpush.msra.mxu0 0.0
    %203 = vmatpush.msra.mxu0 0.0
    %204 = vmatpush.msra.mxu0 0.0
    %205 = vmatpush.msra.mxu0 0.0
    %206 = vmatpush.msra.mxu0 0.0
    %207 = vmatpush.msra.mxu0 0.0
    %208 = vmatpush.msra.mxu0 0.0
    %209 = vmatpush.msra.mxu0 0.0
    %210 = vmatpush.msra.mxu0 0.0
    %211 = vmatpush.msra.mxu0 0.0
    %212 = vmatpush.msra.mxu0 0.0
    %213 = vmatpush.msra.mxu0 0.0
    %214 = vmatpush.msra.mxu0 0.0
    %v215 = vand.u32 %v49, 4294901760
    %216 = vmatpush.msra.mxu0 %v215
    %v217 = vand.u32 %v48, 4294901760
    %218 = vmatpush.msra.mxu0 %v217
    %v219 = vand.u32 %v47, 4294901760
    %220 = vmatpush.msra.mxu0 %v219
    %v221 = vand.u32 %v52, 4294901760
    %222 = vmatmul.f32.gmra.mxu0 %v221
    %v223 = vpop.f32.mrf.mxu0
    %v224 = vadd.f32 %v200, %v223
    %225 = vdwg.mxu0
    %v227 = vsel %vm50, %v36, 0
    %229 = vmatpush.msra.mxu0 0.0
    %230 = vmatpush.msra.mxu0 0.0
    %231 = vmatpush.msra.mxu0 0.0
    %232 = vmatpush.msra.mxu0 0.0
    %233 = vmatpush.msra.mxu0 0.0
    %234 = vmatpush.msra.mxu0 0.0
    %235 = vmatpush.msra.mxu0 0.0
    %236 = vmatpush.msra.mxu0 0.0
    %237 = vmatpush.msra.mxu0 0.0
    %238 = vmatpush.msra.mxu0 0.0
    %239 = vmatpush.msra.mxu0 0.0
    %240 = vmatpush.msra.mxu0 0.0
    %241 = vmatpush.msra.mxu0 0.0
    %v242 = vand.u32 %v39, 4294901760
    %243 = vmatpush.msra.mxu0 %v242
    %v244 = vand.u32 %v38, 4294901760
    %245 = vmatpush.msra.mxu0 %v244
    %v246 = vand.u32 %v37, 4294901760
    %247 = vmatpush.msra.mxu0 %v246
    %v248 = vand.u32 %v227, 4294901760
    %v249 = vsub.f32 %v227, %v248
    %v250 = vand.u32 %v249, 4294901760
    %v251 = vsub.f32 %v249, %v250
    %v252 = vand.u32 %v251, 4294901760
    %253 = vmatmul.f32.gmra.mxu0 %v252
    %v254 = vpop.f32.mrf.mxu0
    %v255 = vadd.f32 %v224, %v254
    %256 = vdwg.mxu0
    %257 = vmatpush.msra.mxu0 0.0
    %258 = vmatpush.msra.mxu0 0.0
    %259 = vmatpush.msra.mxu0 0.0
    %260 = vmatpush.msra.mxu0 0.0
    %261 = vmatpush.msra.mxu0 0.0
    %262 = vmatpush.msra.mxu0 0.0
    %263 = vmatpush.msra.mxu0 0.0
    %264 = vmatpush.msra.mxu0 0.0
    %265 = vmatpush.msra.mxu0 0.0
    %266 = vmatpush.msra.mxu0 0.0
    %267 = vmatpush.msra.mxu0 0.0
    %268 = vmatpush.msra.mxu0 0.0
    %269 = vmatpush.msra.mxu0 0.0
    %v270 = vand.u32 %v39, 4294901760
    %v271 = vsub.f32 %v39, %v270
    %v272 = vand.u32 %v271, 4294901760
    %v273 = vsub.f32 %v271, %v272
    %v274 = vand.u32 %v273, 4294901760
    %275 = vmatpush.msra.mxu0 %v274
    %v276 = vand.u32 %v38, 4294901760
    %v277 = vsub.f32 %v38, %v276
    %v278 = vand.u32 %v277, 4294901760
    %v279 = vsub.f32 %v277, %v278
    %v280 = vand.u32 %v279, 4294901760
    %281 = vmatpush.msra.mxu0 %v280
    %v282 = vand.u32 %v37, 4294901760
    %v283 = vsub.f32 %v37, %v282
    %v284 = vand.u32 %v283, 4294901760
    %v285 = vsub.f32 %v283, %v284
    %v286 = vand.u32 %v285, 4294901760
    %287 = vmatpush.msra.mxu0 %v286
    %v288 = vand.u32 %v227, 4294901760
    %289 = vmatmul.f32.gmra.mxu0 %v288
    %v290 = vpop.f32.mrf.mxu0
    %v291 = vadd.f32 %v255, %v290
    %292 = vdwg.mxu0
    %293 = vmatpush.msra.mxu0 0.0
    %294 = vmatpush.msra.mxu0 0.0
    %295 = vmatpush.msra.mxu0 0.0
    %296 = vmatpush.msra.mxu0 0.0
    %297 = vmatpush.msra.mxu0 0.0
    %298 = vmatpush.msra.mxu0 0.0
    %299 = vmatpush.msra.mxu0 0.0
    %300 = vmatpush.msra.mxu0 0.0
    %301 = vmatpush.msra.mxu0 0.0
    %302 = vmatpush.msra.mxu0 0.0
    %303 = vmatpush.msra.mxu0 0.0
    %304 = vmatpush.msra.mxu0 0.0
    %305 = vmatpush.msra.mxu0 0.0
    %v306 = vand.u32 %v39, 4294901760
    %v307 = vsub.f32 %v39, %v306
    %308 = vmatpush.msra.mxu0 %v307
    %v309 = vand.u32 %v38, 4294901760
    %v310 = vsub.f32 %v38, %v309
    %311 = vmatpush.msra.mxu0 %v310
    %v312 = vand.u32 %v37, 4294901760
    %v313 = vsub.f32 %v37, %v312
    %314 = vmatpush.msra.mxu0 %v313
    %v315 = vand.u32 %v227, 4294901760
    %v316 = vsub.f32 %v227, %v315
    %317 = vmatmul.f32.gmra.mxu0 %v316
    %v318 = vpop.f32.mrf.mxu0
    %v319 = vadd.f32 %v291, %v318
    %320 = vdwg.mxu0
    %321 = vmatpush.msra.mxu0 0.0
    %322 = vmatpush.msra.mxu0 0.0
    %323 = vmatpush.msra.mxu0 0.0
    %324 = vmatpush.msra.mxu0 0.0
    %325 = vmatpush.msra.mxu0 0.0
    %326 = vmatpush.msra.mxu0 0.0
    %327 = vmatpush.msra.mxu0 0.0
    %328 = vmatpush.msra.mxu0 0.0
    %329 = vmatpush.msra.mxu0 0.0
    %330 = vmatpush.msra.mxu0 0.0
    %331 = vmatpush.msra.mxu0 0.0
    %332 = vmatpush.msra.mxu0 0.0
    %333 = vmatpush.msra.mxu0 0.0
    %v334 = vand.u32 %v39, 4294901760
    %335 = vmatpush.msra.mxu0 %v334
    %v336 = vand.u32 %v38, 4294901760
    %337 = vmatpush.msra.mxu0 %v336
    %v338 = vand.u32 %v37, 4294901760
    %339 = vmatpush.msra.mxu0 %v338
    %v340 = vand.u32 %v227, 4294901760
    %v341 = vsub.f32 %v227, %v340
    %v342 = vand.u32 %v341, 4294901760
    %343 = vmatmul.f32.gmra.mxu0 %v342
    %v344 = vpop.f32.mrf.mxu0
    %v345 = vadd.f32 %v319, %v344
    %346 = vdwg.mxu0
    %347 = vmatpush.msra.mxu0 0.0
    %348 = vmatpush.msra.mxu0 0.0
    %349 = vmatpush.msra.mxu0 0.0
    %350 = vmatpush.msra.mxu0 0.0
    %351 = vmatpush.msra.mxu0 0.0
    %352 = vmatpush.msra.mxu0 0.0
    %353 = vmatpush.msra.mxu0 0.0
    %354 = vmatpush.msra.mxu0 0.0
    %355 = vmatpush.msra.mxu0 0.0
    %356 = vmatpush.msra.mxu0 0.0
    %357 = vmatpush.msra.mxu0 0.0
    %358 = vmatpush.msra.mxu0 0.0
    %359 = vmatpush.msra.mxu0 0.0
    %v360 = vand.u32 %v39, 4294901760
    %v361 = vsub.f32 %v39, %v360
    %v362 = vand.u32 %v361, 4294901760
    %363 = vmatpush.msra.mxu0 %v362
    %v364 = vand.u32 %v38, 4294901760
    %v365 = vsub.f32 %v38, %v364
    %v366 = vand.u32 %v365, 4294901760
    %367 = vmatpush.msra.mxu0 %v366
    %v368 = vand.u32 %v37, 4294901760
    %v369 = vsub.f32 %v37, %v368
    %v370 = vand.u32 %v369, 4294901760
    %371 = vmatpush.msra.mxu0 %v370
    %v372 = vand.u32 %v227, 4294901760
    %373 = vmatmul.f32.gmra.mxu0 %v372
    %v374 = vpop.f32.mrf.mxu0
    %v375 = vadd.f32 %v345, %v374
    %376 = vdwg.mxu0
    %377 = vmatpush.msra.mxu0 0.0
    %378 = vmatpush.msra.mxu0 0.0
    %379 = vmatpush.msra.mxu0 0.0
    %380 = vmatpush.msra.mxu0 0.0
    %381 = vmatpush.msra.mxu0 0.0
    %382 = vmatpush.msra.mxu0 0.0
    %383 = vmatpush.msra.mxu0 0.0
    %384 = vmatpush.msra.mxu0 0.0
    %385 = vmatpush.msra.mxu0 0.0
    %386 = vmatpush.msra.mxu0 0.0
    %387 = vmatpush.msra.mxu0 0.0
    %388 = vmatpush.msra.mxu0 0.0
    %389 = vmatpush.msra.mxu0 0.0
    %v390 = vand.u32 %v39, 4294901760
    %391 = vmatpush.msra.mxu0 %v390
    %v392 = vand.u32 %v38, 4294901760
    %393 = vmatpush.msra.mxu0 %v392
    %v394 = vand.u32 %v37, 4294901760
    %395 = vmatpush.msra.mxu0 %v394
    %v396 = vand.u32 %v227, 4294901760
    %397 = vmatmul.f32.gmra.mxu0 %v396
    %v398 = vpop.f32.mrf.mxu0
    %v399 = vadd.f32 %v375, %v398
    %400 = vdwg.mxu0
    %401 = vset.pattern.permute.xlu0 2
    %402 = vperm.xlu0 %401, %v28
    %v403 = vpop.permute.xlu0 %402
    %vm404 = vcmp.eq.s32.totalorder %v30, %v403
    %v405 = vsel %vm404, 1, 0
    %v406 = vcvt.s32.f32 %v405
    %s407 = scalar_lea.vmem [#allocation2], 48
    %v408 = vld [vmem:[%s407] sm:$0xff]
    %v409 = vld [vmem:[%s407 + $0x8] sm:$0xff]
    %v410 = vld [vmem:[%s407 + $0x10] sm:$0xff]
    %v412 = vsel %vm50, %v406, 0
    %414 = vmatpush.msra.mxu0 0.0
    %415 = vmatpush.msra.mxu0 0.0
    %416 = vmatpush.msra.mxu0 0.0
    %417 = vmatpush.msra.mxu0 0.0
    %418 = vmatpush.msra.mxu0 0.0
    %419 = vmatpush.msra.mxu0 0.0
    %420 = vmatpush.msra.mxu0 0.0
    %421 = vmatpush.msra.mxu0 0.0
    %422 = vmatpush.msra.mxu0 0.0
    %423 = vmatpush.msra.mxu0 0.0
    %424 = vmatpush.msra.mxu0 0.0
    %425 = vmatpush.msra.mxu0 0.0
    %426 = vmatpush.msra.mxu0 0.0
    %v427 = vand.u32 %v410, 4294901760
    %428 = vmatpush.msra.mxu0 %v427
    %v429 = vand.u32 %v409, 4294901760
    %430 = vmatpush.msra.mxu0 %v429
    %v431 = vand.u32 %v408, 4294901760
    %432 = vmatpush.msra.mxu0 %v431
    %v433 = vand.u32 %v412, 4294901760
    %v434 = vsub.f32 %v412, %v433
    %v435 = vand.u32 %v434, 4294901760
    %v436 = vsub.f32 %v434, %v435
    %v437 = vand.u32 %v436, 4294901760
    %438 = vmatmul.f32.gmra.mxu0 %v437
    %v439 = vpop.f32.mrf.mxu0
    %v440 = vadd.f32 0.0, %v439
    %441 = vdwg.mxu0
    %442 = vmatpush.msra.mxu0 0.0
    %443 = vmatpush.msra.mxu0 0.0
    %444 = vmatpush.msra.mxu0 0.0
    %445 = vmatpush.msra.mxu0 0.0
    %446 = vmatpush.msra.mxu0 0.0
    %447 = vmatpush.msra.mxu0 0.0
    %448 = vmatpush.msra.mxu0 0.0
    %449 = vmatpush.msra.mxu0 0.0
    %450 = vmatpush.msra.mxu0 0.0
    %451 = vmatpush.msra.mxu0 0.0
    %452 = vmatpush.msra.mxu0 0.0
    %453 = vmatpush.msra.mxu0 0.0
    %454 = vmatpush.msra.mxu0 0.0
    %v455 = vand.u32 %v410, 4294901760
    %v456 = vsub.f32 %v410, %v455
    %v457 = vand.u32 %v456, 4294901760
    %v458 = vsub.f32 %v456, %v457
    %v459 = vand.u32 %v458, 4294901760
    %460 = vmatpush.msra.mxu0 %v459
    %v461 = vand.u32 %v409, 4294901760
    %v462 = vsub.f32 %v409, %v461
    %v463 = vand.u32 %v462, 4294901760
    %v464 = vsub.f32 %v462, %v463
    %v465 = vand.u32 %v464, 4294901760
    %466 = vmatpush.msra.mxu0 %v465
    %v467 = vand.u32 %v408, 4294901760
    %v468 = vsub.f32 %v408, %v467
    %v469 = vand.u32 %v468, 4294901760
    %v470 = vsub.f32 %v468, %v469
    %v471 = vand.u32 %v470, 4294901760
    %472 = vmatpush.msra.mxu0 %v471
    %v473 = vand.u32 %v412, 4294901760
    %474 = vmatmul.f32.gmra.mxu0 %v473
    %v475 = vpop.f32.mrf.mxu0
    %v476 = vadd.f32 %v440, %v475
    %477 = vdwg.mxu0
    %478 = vmatpush.msra.mxu0 0.0
    %479 = vmatpush.msra.mxu0 0.0
    %480 = vmatpush.msra.mxu0 0.0
    %481 = vmatpush.msra.mxu0 0.0
    %482 = vmatpush.msra.mxu0 0.0
    %483 = vmatpush.msra.mxu0 0.0
    %484 = vmatpush.msra.mxu0 0.0
    %485 = vmatpush.msra.mxu0 0.0
    %486 = vmatpush.msra.mxu0 0.0
    %487 = vmatpush.msra.mxu0 0.0
    %488 = vmatpush.msra.mxu0 0.0
    %489 = vmatpush.msra.mxu0 0.0
    %490 = vmatpush.msra.mxu0 0.0
    %v491 = vand.u32 %v410, 4294901760
    %v492 = vsub.f32 %v410, %v491
    %493 = vmatpush.msra.mxu0 %v492
    %v494 = vand.u32 %v409, 4294901760
    %v495 = vsub.f32 %v409, %v494
    %496 = vmatpush.msra.mxu0 %v495
    %v497 = vand.u32 %v408, 4294901760
    %v498 = vsub.f32 %v408, %v497
    %499 = vmatpush.msra.mxu0 %v498
    %v500 = vand.u32 %v412, 4294901760
    %v501 = vsub.f32 %v412, %v500
    %502 = vmatmul.f32.gmra.mxu0 %v501
    %v503 = vpop.f32.mrf.mxu0
    %v504 = vadd.f32 %v476, %v503
    %505 = vdwg.mxu0
    %506 = vmatpush.msra.mxu0 0.0
    %507 = vmatpush.msra.mxu0 0.0
    %508 = vmatpush.msra.mxu0 0.0
    %509 = vmatpush.msra.mxu0 0.0
    %510 = vmatpush.msra.mxu0 0.0
    %511 = vmatpush.msra.mxu0 0.0
    %512 = vmatpush.msra.mxu0 0.0
    %513 = vmatpush.msra.mxu0 0.0
    %514 = vmatpush.msra.mxu0 0.0
    %515 = vmatpush.msra.mxu0 0.0
    %516 = vmatpush.msra.mxu0 0.0
    %517 = vmatpush.msra.mxu0 0.0
    %518 = vmatpush.msra.mxu0 0.0
    %v519 = vand.u32 %v410, 4294901760
    %520 = vmatpush.msra.mxu0 %v519
    %v521 = vand.u32 %v409, 4294901760
    %522 = vmatpush.msra.mxu0 %v521
    %v523 = vand.u32 %v408, 4294901760
    %524 = vmatpush.msra.mxu0 %v523
    %v525 = vand.u32 %v412, 4294901760
    %v526 = vsub.f32 %v412, %v525
    %v527 = vand.u32 %v526, 4294901760
    %528 = vmatmul.f32.gmra.mxu0 %v527
    %v529 = vpop.f32.mrf.mxu0
    %v530 = vadd.f32 %v504, %v529
    %531 = vdwg.mxu0
    %532 = vmatpush.msra.mxu0 0.0
    %533 = vmatpush.msra.mxu0 0.0
    %534 = vmatpush.msra.mxu0 0.0
    %535 = vmatpush.msra.mxu0 0.0
    %536 = vmatpush.msra.mxu0 0.0
    %537 = vmatpush.msra.mxu0 0.0
    %538 = vmatpush.msra.mxu0 0.0
    %539 = vmatpush.msra.mxu0 0.0
    %540 = vmatpush.msra.mxu0 0.0
    %541 = vmatpush.msra.mxu0 0.0
    %542 = vmatpush.msra.mxu0 0.0
    %543 = vmatpush.msra.mxu0 0.0
    %544 = vmatpush.msra.mxu0 0.0
    %v545 = vand.u32 %v410, 4294901760
    %v546 = vsub.f32 %v410, %v545
    %v547 = vand.u32 %v546, 4294901760
    %548 = vmatpush.msra.mxu0 %v547
    %v549 = vand.u32 %v409, 4294901760
    %v550 = vsub.f32 %v409, %v549
    %v551 = vand.u32 %v550, 4294901760
    %552 = vmatpush.msra.mxu0 %v551
    %v553 = vand.u32 %v408, 4294901760
    %v554 = vsub.f32 %v408, %v553
    %v555 = vand.u32 %v554, 4294901760
    %556 = vmatpush.msra.mxu0 %v555
    %v557 = vand.u32 %v412, 4294901760
    %558 = vmatmul.f32.gmra.mxu0 %v557
    %v559 = vpop.f32.mrf.mxu0
    %v560 = vadd.f32 %v530, %v559
    %561 = vdwg.mxu0
    %562 = vmatpush.msra.mxu0 0.0
    %563 = vmatpush.msra.mxu0 0.0
    %564 = vmatpush.msra.mxu0 0.0
    %565 = vmatpush.msra.mxu0 0.0
    %566 = vmatpush.msra.mxu0 0.0
    %567 = vmatpush.msra.mxu0 0.0
    %568 = vmatpush.msra.mxu0 0.0
    %569 = vmatpush.msra.mxu0 0.0
    %570 = vmatpush.msra.mxu0 0.0
    %571 = vmatpush.msra.mxu0 0.0
    %572 = vmatpush.msra.mxu0 0.0
    %573 = vmatpush.msra.mxu0 0.0
    %574 = vmatpush.msra.mxu0 0.0
    %v575 = vand.u32 %v410, 4294901760
    %576 = vmatpush.msra.mxu0 %v575
    %v577 = vand.u32 %v409, 4294901760
    %578 = vmatpush.msra.mxu0 %v577
    %v579 = vand.u32 %v408, 4294901760
    %580 = vmatpush.msra.mxu0 %v579
    %v581 = vand.u32 %v412, 4294901760
    %582 = vmatmul.f32.gmra.mxu0 %v581
    %v583 = vpop.f32.mrf.mxu0
    %v584 = vadd.f32 %v560, %v583
    %585 = vdwg.mxu0
    %v586 = vadd.f32 %v399, %v584
    %587 = vset.pattern.permute.xlu0 3
    %588 = vperm.xlu0 %587, %v28
    %v589 = vpop.permute.xlu0 %588
    %vm590 = vcmp.eq.s32.totalorder %v30, %v589
    %v591 = vsel %vm590, 1, 0
    %v592 = vcvt.s32.f32 %v591
    %s593 = scalar_lea.vmem [#allocation2], 72
    %v594 = vld [vmem:[%s593] sm:$0xff]
    %v595 = vld [vmem:[%s593 + $0x8] sm:$0xff]
    %v596 = vld [vmem:[%s593 + $0x10] sm:$0xff]
    %v598 = vsel %vm50, %v592, 0
    %600 = vmatpush.msra.mxu0 0.0
    %601 = vmatpush.msra.mxu0 0.0
    %602 = vmatpush.msra.mxu0 0.0
    %603 = vmatpush.msra.mxu0 0.0
    %604 = vmatpush.msra.mxu0 0.0
    %605 = vmatpush.msra.mxu0 0.0
    %606 = vmatpush.msra.mxu0 0.0
    %607 = vmatpush.msra.mxu0 0.0
    %608 = vmatpush.msra.mxu0 0.0
    %609 = vmatpush.msra.mxu0 0.0
    %610 = vmatpush.msra.mxu0 0.0
    %611 = vmatpush.msra.mxu0 0.0
    %612 = vmatpush.msra.mxu0 0.0
    %v613 = vand.u32 %v596, 4294901760
    %614 = vmatpush.msra.mxu0 %v613
    %v615 = vand.u32 %v595, 4294901760
    %616 = vmatpush.msra.mxu0 %v615
    %v617 = vand.u32 %v594, 4294901760
    %618 = vmatpush.msra.mxu0 %v617
    %v619 = vand.u32 %v598, 4294901760
    %v620 = vsub.f32 %v598, %v619
    %v621 = vand.u32 %v620, 4294901760
    %v622 = vsub.f32 %v620, %v621
    %v623 = vand.u32 %v622, 4294901760
    %624 = vmatmul.f32.gmra.mxu0 %v623
    %v625 = vpop.f32.mrf.mxu0
    %v626 = vadd.f32 0.0, %v625
    %627 = vdwg.mxu0
    %628 = vmatpush.msra.mxu0 0.0
    %629 = vmatpush.msra.mxu0 0.0
    %630 = vmatpush.msra.mxu0 0.0
    %631 = vmatpush.msra.mxu0 0.0
    %632 = vmatpush.msra.mxu0 0.0
    %633 = vmatpush.msra.mxu0 0.0
    %634 = vmatpush.msra.mxu0 0.0
    %635 = vmatpush.msra.mxu0 0.0
    %636 = vmatpush.msra.mxu0 0.0
    %637 = vmatpush.msra.mxu0 0.0
    %638 = vmatpush.msra.mxu0 0.0
    %639 = vmatpush.msra.mxu0 0.0
    %640 = vmatpush.msra.mxu0 0.0
    %v641 = vand.u32 %v596, 4294901760
    %v642 = vsub.f32 %v596, %v641
    %v643 = vand.u32 %v642, 4294901760
    %v644 = vsub.f32 %v642, %v643
    %v645 = vand.u32 %v644, 4294901760
    %646 = vmatpush.msra.mxu0 %v645
    %v647 = vand.u32 %v595, 4294901760
    %v648 = vsub.f32 %v595, %v647
    %v649 = vand.u32 %v648, 4294901760
    %v650 = vsub.f32 %v648, %v649
    %v651 = vand.u32 %v650, 4294901760
    %652 = vmatpush.msra.mxu0 %v651
    %v653 = vand.u32 %v594, 4294901760
    %v654 = vsub.f32 %v594, %v653
    %v655 = vand.u32 %v654, 4294901760
    %v656 = vsub.f32 %v654, %v655
    %v657 = vand.u32 %v656, 4294901760
    %658 = vmatpush.msra.mxu0 %v657
    %v659 = vand.u32 %v598, 4294901760
    %660 = vmatmul.f32.gmra.mxu0 %v659
    %v661 = vpop.f32.mrf.mxu0
    %v662 = vadd.f32 %v626, %v661
    %663 = vdwg.mxu0
    %664 = vmatpush.msra.mxu0 0.0
    %665 = vmatpush.msra.mxu0 0.0
    %666 = vmatpush.msra.mxu0 0.0
    %667 = vmatpush.msra.mxu0 0.0
    %668 = vmatpush.msra.mxu0 0.0
    %669 = vmatpush.msra.mxu0 0.0
    %670 = vmatpush.msra.mxu0 0.0
    %671 = vmatpush.msra.mxu0 0.0
    %672 = vmatpush.msra.mxu0 0.0
    %673 = vmatpush.msra.mxu0 0.0
    %674 = vmatpush.msra.mxu0 0.0
    %675 = vmatpush.msra.mxu0 0.0
    %676 = vmatpush.msra.mxu0 0.0
    %v677 = vand.u32 %v596, 4294901760
    %v678 = vsub.f32 %v596, %v677
    %679 = vmatpush.msra.mxu0 %v678
    %v680 = vand.u32 %v595, 4294901760
    %v681 = vsub.f32 %v595, %v680
    %682 = vmatpush.msra.mxu0 %v681
    %v683 = vand.u32 %v594, 4294901760
    %v684 = vsub.f32 %v594, %v683
    %685 = vmatpush.msra.mxu0 %v684
    %v686 = vand.u32 %v598, 4294901760
    %v687 = vsub.f32 %v598, %v686
    %688 = vmatmul.f32.gmra.mxu0 %v687
    %v689 = vpop.f32.mrf.mxu0
    %v690 = vadd.f32 %v662, %v689
    %691 = vdwg.mxu0
    %692 = vmatpush.msra.mxu0 0.0
    %693 = vmatpush.msra.mxu0 0.0
    %694 = vmatpush.msra.mxu0 0.0
    %695 = vmatpush.msra.mxu0 0.0
    %696 = vmatpush.msra.mxu0 0.0
    %697 = vmatpush.msra.mxu0 0.0
    %698 = vmatpush.msra.mxu0 0.0
    %699 = vmatpush.msra.mxu0 0.0
    %700 = vmatpush.msra.mxu0 0.0
    %701 = vmatpush.msra.mxu0 0.0
    %702 = vmatpush.msra.mxu0 0.0
    %703 = vmatpush.msra.mxu0 0.0
    %704 = vmatpush.msra.mxu0 0.0
    %v705 = vand.u32 %v596, 4294901760
    %706 = vmatpush.msra.mxu0 %v705
    %v707 = vand.u32 %v595, 4294901760
    %708 = vmatpush.msra.mxu0 %v707
    %v709 = vand.u32 %v594, 4294901760
    %710 = vmatpush.msra.mxu0 %v709
    %v711 = vand.u32 %v598, 4294901760
    %v712 = vsub.f32 %v598, %v711
    %v713 = vand.u32 %v712, 4294901760
    %714 = vmatmul.f32.gmra.mxu0 %v713
    %v715 = vpop.f32.mrf.mxu0
    %v716 = vadd.f32 %v690, %v715
    %717 = vdwg.mxu0
    %718 = vmatpush.msra.mxu0 0.0
    %719 = vmatpush.msra.mxu0 0.0
    %720 = vmatpush.msra.mxu0 0.0
    %721 = vmatpush.msra.mxu0 0.0
    %722 = vmatpush.msra.mxu0 0.0
    %723 = vmatpush.msra.mxu0 0.0
    %724 = vmatpush.msra.mxu0 0.0
    %725 = vmatpush.msra.mxu0 0.0
    %726 = vmatpush.msra.mxu0 0.0
    %727 = vmatpush.msra.mxu0 0.0
    %728 = vmatpush.msra.mxu0 0.0
    %729 = vmatpush.msra.mxu0 0.0
    %730 = vmatpush.msra.mxu0 0.0
    %v731 = vand.u32 %v596, 4294901760
    %v732 = vsub.f32 %v596, %v731
    %v733 = vand.u32 %v732, 4294901760
    %734 = vmatpush.msra.mxu0 %v733
    %v735 = vand.u32 %v595, 4294901760
    %v736 = vsub.f32 %v595, %v735
    %v737 = vand.u32 %v736, 4294901760
    %738 = vmatpush.msra.mxu0 %v737
    %v739 = vand.u32 %v594, 4294901760
    %v740 = vsub.f32 %v594, %v739
    %v741 = vand.u32 %v740, 4294901760
    %742 = vmatpush.msra.mxu0 %v741
    %v743 = vand.u32 %v598, 4294901760
    %744 = vmatmul.f32.gmra.mxu0 %v743
    %v745 = vpop.f32.mrf.mxu0
    %v746 = vadd.f32 %v716, %v745
    %747 = vdwg.mxu0
    %748 = vmatpush.msra.mxu0 0.0
    %749 = vmatpush.msra.mxu0 0.0
    %750 = vmatpush.msra.mxu0 0.0
    %751 = vmatpush.msra.mxu0 0.0
    %752 = vmatpush.msra.mxu0 0.0
    %753 = vmatpush.msra.mxu0 0.0
    %754 = vmatpush.msra.mxu0 0.0
    %755 = vmatpush.msra.mxu0 0.0
    %756 = vmatpush.msra.mxu0 0.0
    %757 = vmatpush.msra.mxu0 0.0
    %758 = vmatpush.msra.mxu0 0.0
    %759 = vmatpush.msra.mxu0 0.0
    %760 = vmatpush.msra.mxu0 0.0
    %v761 = vand.u32 %v596, 4294901760
    %762 = vmatpush.msra.mxu0 %v761
    %v763 = vand.u32 %v595, 4294901760
    %764 = vmatpush.msra.mxu0 %v763
    %v765 = vand.u32 %v594, 4294901760
    %766 = vmatpush.msra.mxu0 %v765
    %v767 = vand.u32 %v598, 4294901760
    %768 = vmatmul.f32.gmra.mxu0 %v767
    %v769 = vpop.f32.mrf.mxu0
    %v770 = vadd.f32 %v746, %v769
    %771 = vdwg.mxu0
    %v772 = vadd.f32 %v586, %v770
    %773 = vst [vmem:[#allocation5] sm:$0xff] %v772
    // Predicated region
    $region14: #{tpu_custom_call.1} parent=1 // pred_check
      _
    $region15: #{tpu_custom_call.1} parent=1 // pred_check_branch
      %775 = sbr.rel (0) target = $region17
    $region16: #{tpu_custom_call.1} parent=1 // pred_region
      %777 = vsyncadd [#allocation4], 0
      %s779 = sshll.u32 [#allocation5], 4
      %s780 = int_to_ptr.vmem [resolvable:$true] %s779
      %s781 = sshll.u32 %s2, 4
      %s782 = int_to_ptr.hbm [resolvable:$true] %s781
      %784 = dma.vmem_to_hbm [thread:$0]  %s780, 128, %s782, [#allocation4]
    $region17: #{tpu_custom_call.1} parent=1 // pred_fallthru
      _
    // Predicated region
    $region18: #{tpu_custom_call.1} parent=1 // pred_check
      _
    $region19: #{tpu_custom_call.1} parent=1 // pred_check_branch
      %786 = sbr.rel (0) target = $region21
    $region20: #{tpu_custom_call.1} parent=1 // pred_region
      %788 = dma.done [#allocation4], 128
    $region21: #{tpu_custom_call.1} parent=1 // pred_fallthru
      _
    %789 = vsyncpa [#allocation3], 1
    %790 = vsyncpa [#allocation4], 1

</llo_original>
